<compile_context>
chip_gen: v5e
topology: v5e:2x2
jax: 0.10.0
libtpu: 0.0.40
codegen_flags: <defaults>
</compile_context>

<pallas_src>
import functools

import jax
import jax.numpy as jnp
from jax.experimental import pallas as pl
from jax.experimental.pallas import tpu as pltpu

LEAKY_SLOPE = 0.1
BN_EPS = 1e-5

_CPARAMS = pltpu.CompilerParams(
    dimension_semantics=("parallel",),
    vmem_limit_bytes=32 * 1024 * 1024,
)


def _leaky(y):
    return jnp.where(y > 0, y, LEAKY_SLOPE * y)


# ----------------------------- Pallas kernels -----------------------------

def _affine_lrelu_kernel(x_ref, scale_ref, shift_ref, o_ref):
    # x_ref: (1, C, HW), scale/shift: (C, 1)  ->  LeakyReLU(x*scale + shift)
    o_ref[0] = _leaky(x_ref[0] * scale_ref[...] + shift_ref[...]).astype(o_ref.dtype)


def _conv_mm_kernel(x_ref, w_ref, b_ref, o_ref):
    # Conv-as-matmul on a pre-activated, channel-major operand.
    # x_ref: (1, K, L)  w_ref: (Cout, K)  b_ref: (Cout, 1)  ->  (1, Cout, L)
    acc = jnp.dot(w_ref[...], x_ref[0], preferred_element_type=jnp.float32)
    o_ref[0] = (acc + b_ref[...]).astype(o_ref.dtype)


def _conv1x1_act_kernel(x_ref, scale_ref, shift_ref, w_ref, b_ref, o_ref):
    # 1x1 conv with the BN-affine + LeakyReLU fused onto its input.
    xa = _leaky(x_ref[0] * scale_ref[...] + shift_ref[...])
    acc = jnp.dot(w_ref[...], xa, preferred_element_type=jnp.float32)
    o_ref[0] = (acc + b_ref[...]).astype(o_ref.dtype)


def _make_conv3x3_s1_kernel(h, w, cin, cout, with_residual):
    """Stride-1 3x3 conv (padding=1) with fused input BN-affine + LeakyReLU.

    The input arrives zero-padded and flattened to (cin, (h+3)*(w+2)).  Every
    3x3 tap of the stencil is then a pure flat-offset slice of that array, so
    the receptive field folds into one (cout, 9*cin) x (9*cin, h*(w+2)) MXU
    matmul.  The output is produced at "padded width" (w+2 columns per row);
    the wrapper drops the two junk columns.
    """
    wp = w + 2
    l_out = h * wp
    offsets = tuple(dy * wp + dx for dy in range(3) for dx in range(3))
    o_center = wp + 1  # center tap == the unpadded image itself

    def kernel(x_ref, scale_ref, shift_ref, mask_ref, w_ref, b_ref, *rest):
        if with_residual:
            res_ref, rscale_ref, rshift_ref, o_ref = rest
        else:
            (o_ref,) = rest
        # Fused pre-activation; the border mask keeps the zero padding at zero.
        xa = mask_ref[...] * _leaky(x_ref[0] * scale_ref[...] + shift_ref[...])
        # In-VMEM im2col: nine flat-shifted views stacked along the K axis.
        patches = jnp.concatenate([xa[:, o:o + l_out] for o in offsets], axis=0)
        acc = jnp.dot(w_ref[...], patches, preferred_element_type=jnp.float32)
        acc = acc + b_ref[...]
        if with_residual:
            # Residual = LeakyReLU(res*scale + shift), recomputed on the fly
            # (never materialized in HBM); its padded-width view is simply the
            # center-tap slice of the padded residual input.
            ra = _leaky(res_ref[0] * rscale_ref[...] + rshift_ref[...])
            acc = acc + ra[:, o_center:o_center + l_out]
        o_ref[0] = acc.astype(o_ref.dtype)

    return kernel


# ----------------------------- Pallas wrappers -----------------------------

def affine_leaky_relu(x, scale, shift):
    """x: (N, C, H, W) -> LeakyReLU(x*scale + shift), per channel."""
    n, c, h, w = x.shape
    hw = h * w
    out = pl.pallas_call(
        _affine_lrelu_kernel,
        out_shape=jax.ShapeDtypeStruct((n, c, hw), x.dtype),
        grid=(n,),
        in_specs=[pl.BlockSpec((1, c, hw), lambda i: (i, 0, 0)),
                  pl.BlockSpec((c, 1), lambda i: (0, 0)),
                  pl.BlockSpec((c, 1), lambda i: (0, 0))],
        out_specs=pl.BlockSpec((1, c, hw), lambda i: (i, 0, 0)),
        compiler_params=_CPARAMS,
    )(x.reshape(n, c, hw), scale.reshape(c, 1), shift.reshape(c, 1))
    return out.reshape(n, c, h, w)


def conv_mm(x_km, w_t, b):
    """out[n] = w_t @ x_km[n] + b.  x_km: (N, K, L), w_t: (Cout, K)."""
    n, k, l = x_km.shape
    cout = w_t.shape[0]
    return pl.pallas_call(
        _conv_mm_kernel,
        out_shape=jax.ShapeDtypeStruct((n, cout, l), x_km.dtype),
        grid=(n,),
        in_specs=[pl.BlockSpec((1, k, l), lambda i: (i, 0, 0)),
                  pl.BlockSpec((cout, k), lambda i: (0, 0)),
                  pl.BlockSpec((cout, 1), lambda i: (0, 0))],
        out_specs=pl.BlockSpec((1, cout, l), lambda i: (i, 0, 0)),
        compiler_params=_CPARAMS,
    )(x_km, w_t, b.reshape(cout, 1))


def conv1x1_act(x_km, scale, shift, w_t, b):
    """1x1 conv of LeakyReLU(x*scale+shift).  x_km: (N, Cin, L), w_t: (Cout, Cin)."""
    n, cin, l = x_km.shape
    cout = w_t.shape[0]
    return pl.pallas_call(
        _conv1x1_act_kernel,
        out_shape=jax.ShapeDtypeStruct((n, cout, l), x_km.dtype),
        grid=(n,),
        in_specs=[pl.BlockSpec((1, cin, l), lambda i: (i, 0, 0)),
                  pl.BlockSpec((cin, 1), lambda i: (0, 0)),
                  pl.BlockSpec((cin, 1), lambda i: (0, 0)),
                  pl.BlockSpec((cout, cin), lambda i: (0, 0)),
                  pl.BlockSpec((cout, 1), lambda i: (0, 0))],
        out_specs=pl.BlockSpec((1, cout, l), lambda i: (i, 0, 0)),
        compiler_params=_CPARAMS,
    )(x_km, scale.reshape(cin, 1), shift.reshape(cin, 1), w_t, b.reshape(cout, 1))


def conv3x3_s1(x_pad_flat, scale, shift, mask, w_t, b, h, w,
               residual_pad_flat=None, res_scale=None, res_shift=None):
    """Fused (BN-affine + LeakyReLU) + stride-1 3x3 conv.  Returns (N, Cout, h, w)."""
    n, cin, lpf = x_pad_flat.shape
    cout = w_t.shape[0]
    wp = w + 2
    l_out = h * wp
    with_res = residual_pad_flat is not None
    kernel = _make_conv3x3_s1_kernel(h, w, cin, cout, with_res)

    in_specs = [pl.BlockSpec((1, cin, lpf), lambda i: (i, 0, 0)),
                pl.BlockSpec((cin, 1), lambda i: (0, 0)),
                pl.BlockSpec((cin, 1), lambda i: (0, 0)),
                pl.BlockSpec((1, lpf), lambda i: (0, 0)),
                pl.BlockSpec((cout, 9 * cin), lambda i: (0, 0)),
                pl.BlockSpec((cout, 1), lambda i: (0, 0))]
    args = [x_pad_flat, scale.reshape(cin, 1), shift.reshape(cin, 1),
            mask, w_t, b.reshape(cout, 1)]
    if with_res:
        in_specs += [pl.BlockSpec((1, cout, lpf), lambda i: (i, 0, 0)),
                     pl.BlockSpec((cout, 1), lambda i: (0, 0)),
                     pl.BlockSpec((cout, 1), lambda i: (0, 0))]
        args += [residual_pad_flat, res_scale.reshape(cout, 1),
                 res_shift.reshape(cout, 1)]

    out = pl.pallas_call(
        kernel,
        out_shape=jax.ShapeDtypeStruct((n, cout, l_out), x_pad_flat.dtype),
        grid=(n,),
        in_specs=in_specs,
        out_specs=pl.BlockSpec((1, cout, l_out), lambda i: (i, 0, 0)),
        compiler_params=_CPARAMS,
    )(*args)
    # Drop the two junk columns per row (conv was evaluated at padded width).
    return out.reshape(n, cout, h, wp)[:, :, :, :w]


# ------------------------------- glue helpers -------------------------------

def _pad_cm_flat(x):
    """(N,C,H,W) -> (N, C, (H+3)*(W+2)): zero pad (top 1, bottom 2, left/right 1), flattened.

    The extra bottom rows keep every flat-shifted 3x3 tap slice in bounds; they
    are zeros and only feed the junk columns that get dropped anyway.
    """
    n, c, h, w = x.shape
    xp = jnp.pad(x, ((0, 0), (0, 0), (1, 2), (1, 1)))
    return xp.reshape(n, c, (h + 3) * (w + 2))


def _border_mask(h, w, dtype):
    """(1, (h+3)*(w+2)) mask: 1 on real pixels, 0 on the zero padding."""
    m = jnp.zeros((h + 3, w + 2), dtype)
    m = m.at[1:h + 1, 1:w + 1].set(1)
    return m.reshape(1, (h + 3) * (w + 2))


def _w3x3_to_mat(w):
    """HWIO (3,3,Cin,Cout) -> (Cout, 9*Cin); K ordered tap-major, channel-minor."""
    kh, kw, cin, cout = w.shape
    return jnp.transpose(w.reshape(kh * kw, cin, cout), (2, 0, 1)).reshape(
        cout, kh * kw * cin)


def bn_scale_shift(x, gamma, beta):
    """Training-mode BatchNorm2d folded into a per-channel affine.

    One-pass batch statistics (biased variance, eps=1e-5) over (N, H, W).
    """
    mean = jnp.mean(x, axis=(0, 2, 3))
    var = jnp.maximum(jnp.mean(jnp.square(x), axis=(0, 2, 3)) - jnp.square(mean), 0.0)
    scale = gamma * jax.lax.rsqrt(var + BN_EPS)
    shift = beta - mean * scale
    return scale, shift


# ----------------------------- module forward -----------------------------

def transition_block(x, p, downsample):
    n, cin, h, w = x.shape
    cout = p["conv1_w"].shape[-1]
    s1, t1 = bn_scale_shift(x, p["bn1_g"], p["bn1_b"])
    w1t = _w3x3_to_mat(p["conv1_w"])

    if downsample:
        ho, wo = h // 2, w // 2
        # Materialize a1 = LeakyReLU(BN1(x)) once (it feeds both strided
        # consumers); this is the only standalone activation kernel per group.
        a1 = affine_leaky_relu(x, s1, t1)
        # Stride-2 conv: gather the 9 taps at *output* resolution (stride is
        # applied before the conv -> no 4x wasted FLOPs / writeback), then one
        # dense (Cout, 9*Cin) x (9*Cin, Ho*Wo) matmul.
        a1p = jnp.pad(a1, ((0, 0), (0, 0), (1, 1), (1, 1)))
        taps = jnp.stack(
            [a1p[:, :, dy:dy + h:2, dx:dx + w:2].reshape(n, cin, ho * wo)
             for dy in range(3) for dx in range(3)], axis=1)
        taps = taps.reshape(n, 9 * cin, ho * wo)
        c1 = conv_mm(taps, w1t, p["conv1_b"]).reshape(n, cout, ho, wo)
        # 1x1 stride-2 shortcut == 1x1 conv of the subsampled activated input.
        sc_in = a1[:, :, ::2, ::2].reshape(n, cin, ho * wo)
        identity = conv_mm(sc_in, p["sc_w"].T, p["sc_b"]).reshape(n, cout, ho, wo)
    else:
        ho, wo = h, w
        xpf = _pad_cm_flat(x)
        mask = _border_mask(h, w, x.dtype)
        c1 = conv3x3_s1(xpf, s1, t1, mask, w1t, p["conv1_b"], h, w)
        identity = conv1x1_act(x.reshape(n, cin, h * w), s1, t1,
                               p["sc_w"].T, p["sc_b"]).reshape(n, cout, ho, wo)

    s2, t2 = bn_scale_shift(c1, p["bn2_g"], p["bn2_b"])
    out = conv3x3_s1(_pad_cm_flat(c1), s2, t2, _border_mask(ho, wo, x.dtype),
                     _w3x3_to_mat(p["conv2_w"]), p["conv2_b"], ho, wo)
    # Residual add of the already-materialized shortcut conv output (glue).
    return out + identity


def basic_block(x, p):
    n, c, h, w = x.shape
    s1, t1 = bn_scale_shift(x, p["bn1_g"], p["bn1_b"])
    xpf = _pad_cm_flat(x)
    mask = _border_mask(h, w, x.dtype)
    c1 = conv3x3_s1(xpf, s1, t1, mask, _w3x3_to_mat(p["conv1_w"]),
                    p["conv1_b"], h, w)
    s2, t2 = bn_scale_shift(c1, p["bn2_g"], p["bn2_b"])
    # conv2 fuses BN2-affine+LeakyReLU on its input AND the residual
    # LeakyReLU(BN1(x)) recomputed in-kernel from the raw padded x.
    out = conv3x3_s1(_pad_cm_flat(c1), s2, t2, mask, _w3x3_to_mat(p["conv2_w"]),
                     p["conv2_b"], h, w,
                     residual_pad_flat=xpf, res_scale=s1, res_shift=t1)
    return out


def conv_group_forward(x_nchw, params, downsample):
    # Matches ConvGroup.forward: TransitionBlock then (blocks-1) BasicBlocks.
    x = transition_block(x_nchw, params["transition"], downsample)
    for bp in params["basic"]:
        x = basic_block(x, bp)
    return x


# ------------------------- deterministic parameters ------------------------

def init_params(key, in_f, out_f, blocks, w_scale=0.2):
    keys = iter(jax.random.split(key, 64))

    def nrm(shape, s=0.1):
        return s * jax.random.normal(next(keys), shape, jnp.float32)

    def bn(c):
        return 1.0 + nrm((c,)), nrm((c,))

    tg1, tb1 = bn(in_f)
    tg2, tb2 = bn(out_f)
    transition = dict(
        bn1_g=tg1, bn1_b=tb1,
        conv1_w=nrm((3, 3, in_f, out_f), w_scale),   # HWIO
        conv1_b=nrm((out_f,)),
        bn2_g=tg2, bn2_b=tb2,
        conv2_w=nrm((3, 3, out_f, out_f), w_scale),
        conv2_b=nrm((out_f,)),
        sc_w=nrm((in_f, out_f), w_scale),
        sc_b=nrm((out_f,)),
    )
    basics = []
    for _ in range(blocks - 1):
        g1, b1 = bn(out_f)
        g2, b2 = bn(out_f)
        basics.append(dict(
            bn1_g=g1, bn1_b=b1,
            conv1_w=nrm((3, 3, out_f, out_f), w_scale), conv1_b=nrm((out_f,)),
            bn2_g=g2, bn2_b=b2,
            conv2_w=nrm((3, 3, out_f, out_f), w_scale), conv2_b=nrm((out_f,)),
        ))
    return dict(transition=transition, basic=basics)


# ----------------------------- pure-JAX reference ---------------------------

def _ref_conv3x3(x, w, b, stride=1):
    out = jax.lax.conv_general_dilated(
        x, w, window_strides=(stride, stride), padding=((1, 1), (1, 1)),
        dimension_numbers=("NHWC", "HWIO", "NHWC"),
        precision=jax.lax.Precision.HIGHEST)
    return out + b


def _ref_conv1x1(x, w, b, stride=1):
    out = jax.lax.conv_general_dilated(
        x, w[None, None], window_strides=(stride, stride), padding="VALID",
        dimension_numbers=("NHWC", "HWIO", "NHWC"),
        precision=jax.lax.Precision.HIGHEST)
    return out + b


def _ref_bn_lrelu(x, g, bt):
    mean = jnp.mean(x, axis=(0, 1, 2))
    var = jnp.mean(jnp.square(x - mean), axis=(0, 1, 2))
    y = (x - mean) / jnp.sqrt(var + BN_EPS) * g + bt
    return jnp.where(y > 0, y, LEAKY_SLOPE * y)


def ref_forward(x_nchw, params, downsample):
    x = jnp.transpose(x_nchw, (0, 2, 3, 1))
    stride = 2 if downsample else 1
    p = params["transition"]
    x = _ref_bn_lrelu(x, p["bn1_g"], p["bn1_b"])
    identity = _ref_conv1x1(x, p["sc_w"], p["sc_b"], stride)
    out = _ref_conv3x3(x, p["conv1_w"], p["conv1_b"], stride)
    out = _ref_bn_lrelu(out, p["bn2_g"], p["bn2_b"])
    x = _ref_conv3x3(out, p["conv2_w"], p["conv2_b"]) + identity
    for p in params["basic"]:
        h = _ref_bn_lrelu(x, p["bn1_g"], p["bn1_b"])
        out = _ref_conv3x3(h, p["conv1_w"], p["conv1_b"])
        out = _ref_bn_lrelu(out, p["bn2_g"], p["bn2_b"])
        x = _ref_conv3x3(out, p["conv2_w"], p["conv2_b"]) + h
    return jnp.transpose(x, (0, 3, 1, 2))


# ----------------------------------- main -----------------------------------

if __name__ == "__main__":
    key = jax.random.PRNGKey(0)
    kx, kp = jax.random.split(key)

    # ConvGroup(in_features=4, out_features=8, blocks=2, bias=True)
    N, C_IN, H, W = 2, 4, 16, 16
    C_OUT, BLOCKS = 8, 2
    x = jax.random.normal(kx, (N, C_IN, H, W), jnp.float32)   # NCHW, like PyTorch
    params = init_params(kp, C_IN, C_OUT, BLOCKS)

    for downsample in (True, False):
        fwd = jax.jit(functools.partial(conv_group_forward, downsample=downsample))
        out = jax.block_until_ready(fwd(x, params))
        exp_hw = (H // 2, W // 2) if downsample else (H, W)
        assert out.shape == (N, C_OUT) + exp_hw, out.shape
        ref = ref_forward(x, params, downsample)
        # f32 everywhere; tolerance leaves margin only for MXU f32 pass
        # decomposition / accumulation-order differences.
        if not jnp.allclose(out, ref, atol=1e-3, rtol=1e-3):
            raise RuntimeError(
                f"mismatch vs reference (downsample={downsample}): "
                f"max abs diff {float(jnp.max(jnp.abs(out - ref)))}")
    print("KERNEL_OK")
</pallas_src>

<mosaic_0001>
module attributes {stable_mosaic.version = 11 : i64} {
  func.func @_affine_lrelu_kernel(%arg0: i32, %arg1: memref<1x4x256xf32, #tpu.memory_space<vmem>>, %arg2: memref<4x1xf32, #tpu.memory_space<vmem>>, %arg3: memref<4x1xf32, #tpu.memory_space<vmem>>, %arg4: memref<1x4x256xf32, #tpu.memory_space<vmem>>) attributes {dimension_semantics = [#tpu.dimension_semantics<parallel>], iteration_bounds = array<i64: 2>, scalar_prefetch = 0 : i64, scratch_operands = 0 : i64, tpu.core_type = #tpu.core_type<tc>, window_params = [{transform_indices = @transform_0, window_bounds = array<i64: 1, 4, 256>}, {pipeline_mode = #tpu.pipeline_mode<synchronous>, transform_indices = @transform_1, window_bounds = array<i64: 4, 1>}, {pipeline_mode = #tpu.pipeline_mode<synchronous>, transform_indices = @transform_2, window_bounds = array<i64: 4, 1>}, {transform_indices = @transform_3, window_bounds = array<i64: 1, 4, 256>}]} {
    %c0 = arith.constant 0 : index
    %c0_0 = arith.constant 0 : index
    %c0_1 = arith.constant 0 : index
    %0 = vector.load %arg1[%c0, %c0_0, %c0_1] : memref<1x4x256xf32, #tpu.memory_space<vmem>>, vector<1x4x256xf32>
    %1 = vector.shape_cast %0 : vector<1x4x256xf32> to vector<4x256xf32>
    %c0_2 = arith.constant 0 : index
    %c0_3 = arith.constant 0 : index
    %2 = vector.load %arg2[%c0_2, %c0_3] : memref<4x1xf32, #tpu.memory_space<vmem>>, vector<4x1xf32>
    %3 = vector.broadcast %2 : vector<4x1xf32> to vector<4x256xf32>
    %4 = arith.mulf %1, %3 : vector<4x256xf32>
    %c0_4 = arith.constant 0 : index
    %c0_5 = arith.constant 0 : index
    %5 = vector.load %arg3[%c0_4, %c0_5] : memref<4x1xf32, #tpu.memory_space<vmem>>, vector<4x1xf32>
    %6 = vector.broadcast %5 : vector<4x1xf32> to vector<4x256xf32>
    %7 = arith.addf %4, %6 : vector<4x256xf32>
    %cst = arith.constant 0.000000e+00 : f32
    %8 = vector.broadcast %cst : f32 to vector<4x256xf32>
    %9 = arith.cmpf ogt, %7, %8 : vector<4x256xf32>
    %cst_6 = arith.constant 1.000000e-01 : f32
    %10 = vector.broadcast %cst_6 : f32 to vector<4x256xf32>
    %11 = arith.mulf %10, %7 : vector<4x256xf32>
    %12 = arith.select %9, %7, %11 : vector<4x256xi1>, vector<4x256xf32>
    %c0_7 = arith.constant 0 : index
    %c0_8 = arith.constant 0 : index
    %c0_9 = arith.constant 0 : index
    %13 = vector.load %arg4[%c0_7, %c0_8, %c0_9] : memref<1x4x256xf32, #tpu.memory_space<vmem>>, vector<1x4x256xf32>
    %14 = vector.shape_cast %13 : vector<1x4x256xf32> to vector<4x256xf32>
    %15 = vector.shape_cast %12 : vector<4x256xf32> to vector<1x4x256xf32>
    tpu.vector_store %arg4[%c0_7, %c0_8, %c0_9], %15 {strides = array<i32>} : memref<1x4x256xf32, #tpu.memory_space<vmem>>, vector<1x4x256xf32>,
    return
  }
  func.func @transform_0(%arg0: i32) -> (i32, i32, i32) {
    %c0_i32 = arith.constant 0 : i32
    %c0_i32_0 = arith.constant 0 : i32
    %c0_i32_1 = arith.constant 0 : i32
    return %arg0, %c0_i32, %c0_i32_0 : i32, i32, i32
  }
  func.func @transform_1(%arg0: i32) -> (i32, i32) {
    %c0_i32 = arith.constant 0 : i32
    %c0_i32_0 = arith.constant 0 : i32
    %c0_i32_1 = arith.constant 0 : i32
    return %c0_i32, %c0_i32_0 : i32, i32
  }
  func.func @transform_2(%arg0: i32) -> (i32, i32) {
    %c0_i32 = arith.constant 0 : i32
    %c0_i32_0 = arith.constant 0 : i32
    %c0_i32_1 = arith.constant 0 : i32
    return %c0_i32, %c0_i32_0 : i32, i32
  }
  func.func @transform_3(%arg0: i32) -> (i32, i32, i32) {
    %c0_i32 = arith.constant 0 : i32
    %c0_i32_0 = arith.constant 0 : i32
    %c0_i32_1 = arith.constant 0 : i32
    return %arg0, %c0_i32, %c0_i32_0 : i32, i32, i32
  }
}

module attributes {stable_mosaic.version = 11 : i64} {
  func.func @_conv_mm_kernel(%arg0: i32, %arg1: memref<1x36x64xf32, #tpu.memory_space<vmem>>, %arg2: memref<8x36xf32, #tpu.memory_space<vmem>>, %arg3: memref<8x1xf32, #tpu.memory_space<vmem>>, %arg4: memref<1x8x64xf32, #tpu.memory_space<vmem>>) attributes {dimension_semantics = [#tpu.dimension_semantics<parallel>], iteration_bounds = array<i64: 2>, scalar_prefetch = 0 : i64, scratch_operands = 0 : i64, tpu.core_type = #tpu.core_type<tc>, window_params = [{transform_indices = @transform_0, window_bounds = array<i64: 1, 36, 64>}, {pipeline_mode = #tpu.pipeline_mode<synchronous>, transform_indices = @transform_1, window_bounds = array<i64: 8, 36>}, {pipeline_mode = #tpu.pipeline_mode<synchronous>, transform_indices = @transform_2, window_bounds = array<i64: 8, 1>}, {transform_indices = @transform_3, window_bounds = array<i64: 1, 8, 64>}]} {
    %c0 = arith.constant 0 : index
    %c0_0 = arith.constant 0 : index
    %0 = vector.load %arg2[%c0, %c0_0] : memref<8x36xf32, #tpu.memory_space<vmem>>, vector<8x36xf32>
    %c0_1 = arith.constant 0 : index
    %c0_2 = arith.constant 0 : index
    %c0_3 = arith.constant 0 : index
    %1 = vector.load %arg1[%c0_1, %c0_2, %c0_3] : memref<1x36x64xf32, #tpu.memory_space<vmem>>, vector<1x36x64xf32>
    %2 = vector.shape_cast %1 : vector<1x36x64xf32> to vector<36x64xf32>
    %cst = arith.constant dense<0.000000e+00> : vector<8x64xf32>
    %3 = tpu.matmul %0, %2, %cst {dimension_numbers = #tpu.dot_dimension_numbers<[1], [0], [0], [1], [0, 0, 1, 1], [], []>} : vector<8x36xf32>, vector<36x64xf32>, vector<8x64xf32> -> vector<8x64xf32>
    %c0_4 = arith.constant 0 : index
    %c0_5 = arith.constant 0 : index
    %4 = vector.load %arg3[%c0_4, %c0_5] : memref<8x1xf32, #tpu.memory_space<vmem>>, vector<8x1xf32>
    %5 = vector.broadcast %4 : vector<8x1xf32> to vector<8x64xf32>
    %6 = arith.addf %3, %5 : vector<8x64xf32>
    %c0_6 = arith.constant 0 : index
    %c0_7 = arith.constant 0 : index
    %c0_8 = arith.constant 0 : index
    %7 = vector.load %arg4[%c0_6, %c0_7, %c0_8] : memref<1x8x64xf32, #tpu.memory_space<vmem>>, vector<1x8x64xf32>
    %8 = vector.shape_cast %7 : vector<1x8x64xf32> to vector<8x64xf32>
    %9 = vector.shape_cast %6 : vector<8x64xf32> to vector<1x8x64xf32>
    tpu.vector_store %arg4[%c0_6, %c0_7, %c0_8], %9 {strides = array<i32>} : memref<1x8x64xf32, #tpu.memory_space<vmem>>, vector<1x8x64xf32>,
    return
  }
  func.func @transform_0(%arg0: i32) -> (i32, i32, i32) {
    %c0_i32 = arith.constant 0 : i32
    %c0_i32_0 = arith.constant 0 : i32
    %c0_i32_1 = arith.constant 0 : i32
    return %arg0, %c0_i32, %c0_i32_0 : i32, i32, i32
  }
  func.func @transform_1(%arg0: i32) -> (i32, i32) {
    %c0_i32 = arith.constant 0 : i32
    %c0_i32_0 = arith.constant 0 : i32
    %c0_i32_1 = arith.constant 0 : i32
    return %c0_i32, %c0_i32_0 : i32, i32
  }
  func.func @transform_2(%arg0: i32) -> (i32, i32) {
    %c0_i32 = arith.constant 0 : i32
    %c0_i32_0 = arith.constant 0 : i32
    %c0_i32_1 = arith.constant 0 : i32
    return %c0_i32, %c0_i32_0 : i32, i32
  }
  func.func @transform_3(%arg0: i32) -> (i32, i32, i32) {
    %c0_i32 = arith.constant 0 : i32
    %c0_i32_0 = arith.constant 0 : i32
    %c0_i32_1 = arith.constant 0 : i32
    return %arg0, %c0_i32, %c0_i32_0 : i32, i32, i32
  }
}

module attributes {stable_mosaic.version = 11 : i64} {
  func.func @kernel(%arg0: i32, %arg1: memref<1x8x110xf32, #tpu.memory_space<vmem>>, %arg2: memref<8x1xf32, #tpu.memory_space<vmem>>, %arg3: memref<8x1xf32, #tpu.memory_space<vmem>>, %arg4: memref<1x110xf32, #tpu.memory_space<vmem>>, %arg5: memref<8x72xf32, #tpu.memory_space<vmem>>, %arg6: memref<8x1xf32, #tpu.memory_space<vmem>>, %arg7: memref<1x8x80xf32, #tpu.memory_space<vmem>>) attributes {dimension_semantics = [#tpu.dimension_semantics<parallel>], iteration_bounds = array<i64: 2>, scalar_prefetch = 0 : i64, scratch_operands = 0 : i64, tpu.core_type = #tpu.core_type<tc>, window_params = [{transform_indices = @transform_0, window_bounds = array<i64: 1, 8, 110>}, {pipeline_mode = #tpu.pipeline_mode<synchronous>, transform_indices = @transform_1, window_bounds = array<i64: 8, 1>}, {pipeline_mode = #tpu.pipeline_mode<synchronous>, transform_indices = @transform_2, window_bounds = array<i64: 8, 1>}, {pipeline_mode = #tpu.pipeline_mode<synchronous>, transform_indices = @transform_3, window_bounds = array<i64: 1, 110>}, {pipeline_mode = #tpu.pipeline_mode<synchronous>, transform_indices = @transform_4, window_bounds = array<i64: 8, 72>}, {pipeline_mode = #tpu.pipeline_mode<synchronous>, transform_indices = @transform_5, window_bounds = array<i64: 8, 1>}, {transform_indices = @transform_6, window_bounds = array<i64: 1, 8, 80>}]} {
    %c0 = arith.constant 0 : index
    %c0_0 = arith.constant 0 : index
    %0 = vector.load %arg4[%c0, %c0_0] : memref<1x110xf32, #tpu.memory_space<vmem>>, vector<1x110xf32>
    %c0_1 = arith.constant 0 : index
    %c0_2 = arith.constant 0 : index
    %c0_3 = arith.constant 0 : index
    %1 = vector.load %arg1[%c0_1, %c0_2, %c0_3] : memref<1x8x110xf32, #tpu.memory_space<vmem>>, vector<1x8x110xf32>
    %2 = vector.shape_cast %1 : vector<1x8x110xf32> to vector<8x110xf32>
    %c0_4 = arith.constant 0 : index
    %c0_5 = arith.constant 0 : index
    %3 = vector.load %arg2[%c0_4, %c0_5] : memref<8x1xf32, #tpu.memory_space<vmem>>, vector<8x1xf32>
    %4 = vector.broadcast %3 : vector<8x1xf32> to vector<8x110xf32>
    %5 = arith.mulf %2, %4 : vector<8x110xf32>
    %c0_6 = arith.constant 0 : index
    %c0_7 = arith.constant 0 : index
    %6 = vector.load %arg3[%c0_6, %c0_7] : memref<8x1xf32, #tpu.memory_space<vmem>>, vector<8x1xf32>
    %7 = vector.broadcast %6 : vector<8x1xf32> to vector<8x110xf32>
    %8 = arith.addf %5, %7 : vector<8x110xf32>
    %cst = arith.constant 0.000000e+00 : f32
    %9 = vector.broadcast %cst : f32 to vector<8x110xf32>
    %10 = arith.cmpf ogt, %8, %9 : vector<8x110xf32>
    %cst_8 = arith.constant 1.000000e-01 : f32
    %11 = vector.broadcast %cst_8 : f32 to vector<8x110xf32>
    %12 = arith.mulf %11, %8 : vector<8x110xf32>
    %13 = arith.select %10, %8, %12 : vector<8x110xi1>, vector<8x110xf32>
    %14 = vector.broadcast %0 : vector<1x110xf32> to vector<8x110xf32>
    %15 = arith.mulf %14, %13 : vector<8x110xf32>
    %16 = vector.extract_strided_slice %15 {offsets = [0, 0], sizes = [8, 80], strides = [1, 1]} : vector<8x110xf32> to vector<8x80xf32>
    %17 = vector.extract_strided_slice %15 {offsets = [0, 1], sizes = [8, 80], strides = [1, 1]} : vector<8x110xf32> to vector<8x80xf32>
    %18 = vector.extract_strided_slice %15 {offsets = [0, 2], sizes = [8, 80], strides = [1, 1]} : vector<8x110xf32> to vector<8x80xf32>
    %19 = vector.extract_strided_slice %15 {offsets = [0, 10], sizes = [8, 80], strides = [1, 1]} : vector<8x110xf32> to vector<8x80xf32>
    %20 = vector.extract_strided_slice %15 {offsets = [0, 11], sizes = [8, 80], strides = [1, 1]} : vector<8x110xf32> to vector<8x80xf32>
    %21 = vector.extract_strided_slice %15 {offsets = [0, 12], sizes = [8, 80], strides = [1, 1]} : vector<8x110xf32> to vector<8x80xf32>
    %22 = vector.extract_strided_slice %15 {offsets = [0, 20], sizes = [8, 80], strides = [1, 1]} : vector<8x110xf32> to vector<8x80xf32>
    %23 = vector.extract_strided_slice %15 {offsets = [0, 21], sizes = [8, 80], strides = [1, 1]} : vector<8x110xf32> to vector<8x80xf32>
    %24 = vector.extract_strided_slice %15 {offsets = [0, 22], sizes = [8, 80], strides = [1, 1]} : vector<8x110xf32> to vector<8x80xf32>
    %25 = tpu.concatenate %16, %17, %18, %19, %20, %21, %22, %23, %24 in 0 : vector<8x80xf32>, vector<8x80xf32>, vector<8x80xf32>, vector<8x80xf32>, vector<8x80xf32>, vector<8x80xf32>, vector<8x80xf32>, vector<8x80xf32>, vector<8x80xf32> -> vector<72x80xf32>
    %c0_9 = arith.constant 0 : index
    %c0_10 = arith.constant 0 : index
    %26 = vector.load %arg5[%c0_9, %c0_10] : memref<8x72xf32, #tpu.memory_space<vmem>>, vector<8x72xf32>
    %cst_11 = arith.constant dense<0.000000e+00> : vector<8x80xf32>
    %27 = tpu.matmul %26, %25, %cst_11 {dimension_numbers = #tpu.dot_dimension_numbers<[1], [0], [0], [1], [0, 0, 1, 1], [], []>} : vector<8x72xf32>, vector<72x80xf32>, vector<8x80xf32> -> vector<8x80xf32>
    %c0_12 = arith.constant 0 : index
    %c0_13 = arith.constant 0 : index
    %28 = vector.load %arg6[%c0_12, %c0_13] : memref<8x1xf32, #tpu.memory_space<vmem>>, vector<8x1xf32>
    %29 = vector.broadcast %28 : vector<8x1xf32> to vector<8x80xf32>
    %30 = arith.addf %27, %29 : vector<8x80xf32>
    %c0_14 = arith.constant 0 : index
    %c0_15 = arith.constant 0 : index
    %c0_16 = arith.constant 0 : index
    %31 = vector.load %arg7[%c0_14, %c0_15, %c0_16] : memref<1x8x80xf32, #tpu.memory_space<vmem>>, vector<1x8x80xf32>
    %32 = vector.shape_cast %31 : vector<1x8x80xf32> to vector<8x80xf32>
    %33 = vector.shape_cast %30 : vector<8x80xf32> to vector<1x8x80xf32>
    tpu.vector_store %arg7[%c0_14, %c0_15, %c0_16], %33 {strides = array<i32>} : memref<1x8x80xf32, #tpu.memory_space<vmem>>, vector<1x8x80xf32>,
    return
  }
  func.func @transform_0(%arg0: i32) -> (i32, i32, i32) {
    %c0_i32 = arith.constant 0 : i32
    %c0_i32_0 = arith.constant 0 : i32
    %c0_i32_1 = arith.constant 0 : i32
    return %arg0, %c0_i32, %c0_i32_0 : i32, i32, i32
  }
  func.func @transform_1(%arg0: i32) -> (i32, i32) {
    %c0_i32 = arith.constant 0 : i32
    %c0_i32_0 = arith.constant 0 : i32
    %c0_i32_1 = arith.constant 0 : i32
    return %c0_i32, %c0_i32_0 : i32, i32
  }
  func.func @transform_2(%arg0: i32) -> (i32, i32) {
    %c0_i32 = arith.constant 0 : i32
    %c0_i32_0 = arith.constant 0 : i32
    %c0_i32_1 = arith.constant 0 : i32
    return %c0_i32, %c0_i32_0 : i32, i32
  }
  func.func @transform_3(%arg0: i32) -> (i32, i32) {
    %c0_i32 = arith.constant 0 : i32
    %c0_i32_0 = arith.constant 0 : i32
    %c0_i32_1 = arith.constant 0 : i32
    return %c0_i32, %c0_i32_0 : i32, i32
  }
  func.func @transform_4(%arg0: i32) -> (i32, i32) {
    %c0_i32 = arith.constant 0 : i32
    %c0_i32_0 = arith.constant 0 : i32
    %c0_i32_1 = arith.constant 0 : i32
    return %c0_i32, %c0_i32_0 : i32, i32
  }
  func.func @transform_5(%arg0: i32) -> (i32, i32) {
    %c0_i32 = arith.constant 0 : i32
    %c0_i32_0 = arith.constant 0 : i32
    %c0_i32_1 = arith.constant 0 : i32
    return %c0_i32, %c0_i32_0 : i32, i32
  }
  func.func @transform_6(%arg0: i32) -> (i32, i32, i32) {
    %c0_i32 = arith.constant 0 : i32
    %c0_i32_0 = arith.constant 0 : i32
    %c0_i32_1 = arith.constant 0 : i32
    return %arg0, %c0_i32, %c0_i32_0 : i32, i32, i32
  }
}

module attributes {stable_mosaic.version = 11 : i64} {
  func.func @_conv_mm_kernel(%arg0: i32, %arg1: memref<1x4x64xf32, #tpu.memory_space<vmem>>, %arg2: memref<8x4xf32, #tpu.memory_space<vmem>>, %arg3: memref<8x1xf32, #tpu.memory_space<vmem>>, %arg4: memref<1x8x64xf32, #tpu.memory_space<vmem>>) attributes {dimension_semantics = [#tpu.dimension_semantics<parallel>], iteration_bounds = array<i64: 2>, scalar_prefetch = 0 : i64, scratch_operands = 0 : i64, tpu.core_type = #tpu.core_type<tc>, window_params = [{transform_indices = @transform_0, window_bounds = array<i64: 1, 4, 64>}, {pipeline_mode = #tpu.pipeline_mode<synchronous>, transform_indices = @transform_1, window_bounds = array<i64: 8, 4>}, {pipeline_mode = #tpu.pipeline_mode<synchronous>, transform_indices = @transform_2, window_bounds = array<i64: 8, 1>}, {transform_indices = @transform_3, window_bounds = array<i64: 1, 8, 64>}]} {
    %c0 = arith.constant 0 : index
    %c0_0 = arith.constant 0 : index
    %0 = vector.load %arg2[%c0, %c0_0] : memref<8x4xf32, #tpu.memory_space<vmem>>, vector<8x4xf32>
    %c0_1 = arith.constant 0 : index
    %c0_2 = arith.constant 0 : index
    %c0_3 = arith.constant 0 : index
    %1 = vector.load %arg1[%c0_1, %c0_2, %c0_3] : memref<1x4x64xf32, #tpu.memory_space<vmem>>, vector<1x4x64xf32>
    %2 = vector.shape_cast %1 : vector<1x4x64xf32> to vector<4x64xf32>
    %cst = arith.constant dense<0.000000e+00> : vector<8x64xf32>
    %3 = tpu.matmul %0, %2, %cst {dimension_numbers = #tpu.dot_dimension_numbers<[1], [0], [0], [1], [0, 0, 1, 1], [], []>} : vector<8x4xf32>, vector<4x64xf32>, vector<8x64xf32> -> vector<8x64xf32>
    %c0_4 = arith.constant 0 : index
    %c0_5 = arith.constant 0 : index
    %4 = vector.load %arg3[%c0_4, %c0_5] : memref<8x1xf32, #tpu.memory_space<vmem>>, vector<8x1xf32>
    %5 = vector.broadcast %4 : vector<8x1xf32> to vector<8x64xf32>
    %6 = arith.addf %3, %5 : vector<8x64xf32>
    %c0_6 = arith.constant 0 : index
    %c0_7 = arith.constant 0 : index
    %c0_8 = arith.constant 0 : index
    %7 = vector.load %arg4[%c0_6, %c0_7, %c0_8] : memref<1x8x64xf32, #tpu.memory_space<vmem>>, vector<1x8x64xf32>
    %8 = vector.shape_cast %7 : vector<1x8x64xf32> to vector<8x64xf32>
    %9 = vector.shape_cast %6 : vector<8x64xf32> to vector<1x8x64xf32>
    tpu.vector_store %arg4[%c0_6, %c0_7, %c0_8], %9 {strides = array<i32>} : memref<1x8x64xf32, #tpu.memory_space<vmem>>, vector<1x8x64xf32>,
    return
  }
  func.func @transform_0(%arg0: i32) -> (i32, i32, i32) {
    %c0_i32 = arith.constant 0 : i32
    %c0_i32_0 = arith.constant 0 : i32
    %c0_i32_1 = arith.constant 0 : i32
    return %arg0, %c0_i32, %c0_i32_0 : i32, i32, i32
  }
  func.func @transform_1(%arg0: i32) -> (i32, i32) {
    %c0_i32 = arith.constant 0 : i32
    %c0_i32_0 = arith.constant 0 : i32
    %c0_i32_1 = arith.constant 0 : i32
    return %c0_i32, %c0_i32_0 : i32, i32
  }
  func.func @transform_2(%arg0: i32) -> (i32, i32) {
    %c0_i32 = arith.constant 0 : i32
    %c0_i32_0 = arith.constant 0 : i32
    %c0_i32_1 = arith.constant 0 : i32
    return %c0_i32, %c0_i32_0 : i32, i32
  }
  func.func @transform_3(%arg0: i32) -> (i32, i32, i32) {
    %c0_i32 = arith.constant 0 : i32
    %c0_i32_0 = arith.constant 0 : i32
    %c0_i32_1 = arith.constant 0 : i32
    return %arg0, %c0_i32, %c0_i32_0 : i32, i32, i32
  }
}

module attributes {stable_mosaic.version = 11 : i64} {
  func.func @kernel(%arg0: i32, %arg1: memref<1x8x110xf32, #tpu.memory_space<vmem>>, %arg2: memref<8x1xf32, #tpu.memory_space<vmem>>, %arg3: memref<8x1xf32, #tpu.memory_space<vmem>>, %arg4: memref<1x110xf32, #tpu.memory_space<vmem>>, %arg5: memref<8x72xf32, #tpu.memory_space<vmem>>, %arg6: memref<8x1xf32, #tpu.memory_space<vmem>>, %arg7: memref<1x8x110xf32, #tpu.memory_space<vmem>>, %arg8: memref<8x1xf32, #tpu.memory_space<vmem>>, %arg9: memref<8x1xf32, #tpu.memory_space<vmem>>, %arg10: memref<1x8x80xf32, #tpu.memory_space<vmem>>) attributes {dimension_semantics = [#tpu.dimension_semantics<parallel>], iteration_bounds = array<i64: 2>, scalar_prefetch = 0 : i64, scratch_operands = 0 : i64, tpu.core_type = #tpu.core_type<tc>, window_params = [{transform_indices = @transform_0, window_bounds = array<i64: 1, 8, 110>}, {pipeline_mode = #tpu.pipeline_mode<synchronous>, transform_indices = @transform_1, window_bounds = array<i64: 8, 1>}, {pipeline_mode = #tpu.pipeline_mode<synchronous>, transform_indices = @transform_2, window_bounds = array<i64: 8, 1>}, {pipeline_mode = #tpu.pipeline_mode<synchronous>, transform_indices = @transform_3, window_bounds = array<i64: 1, 110>}, {pipeline_mode = #tpu.pipeline_mode<synchronous>, transform_indices = @transform_4, window_bounds = array<i64: 8, 72>}, {pipeline_mode = #tpu.pipeline_mode<synchronous>, transform_indices = @transform_5, window_bounds = array<i64: 8, 1>}, {transform_indices = @transform_6, window_bounds = array<i64: 1, 8, 110>}, {pipeline_mode = #tpu.pipeline_mode<synchronous>, transform_indices = @transform_7, window_bounds = array<i64: 8, 1>}, {pipeline_mode = #tpu.pipeline_mode<synchronous>, transform_indices = @transform_8, window_bounds = array<i64: 8, 1>}, {transform_indices = @transform_9, window_bounds = array<i64: 1, 8, 80>}]} {
    %c0 = arith.constant 0 : index
    %c0_0 = arith.constant 0 : index
    %0 = vector.load %arg4[%c0, %c0_0] : memref<1x110xf32, #tpu.memory_space<vmem>>, vector<1x110xf32>
    %c0_1 = arith.constant 0 : index
    %c0_2 = arith.constant 0 : index
    %c0_3 = arith.constant 0 : index
    %1 = vector.load %arg1[%c0_1, %c0_2, %c0_3] : memref<1x8x110xf32, #tpu.memory_space<vmem>>, vector<1x8x110xf32>
    %2 = vector.shape_cast %1 : vector<1x8x110xf32> to vector<8x110xf32>
    %c0_4 = arith.constant 0 : index
    %c0_5 = arith.constant 0 : index
    %3 = vector.load %arg2[%c0_4, %c0_5] : memref<8x1xf32, #tpu.memory_space<vmem>>, vector<8x1xf32>
    %4 = vector.broadcast %3 : vector<8x1xf32> to vector<8x110xf32>
    %5 = arith.mulf %2, %4 : vector<8x110xf32>
    %c0_6 = arith.constant 0 : index
    %c0_7 = arith.constant 0 : index
    %6 = vector.load %arg3[%c0_6, %c0_7] : memref<8x1xf32, #tpu.memory_space<vmem>>, vector<8x1xf32>
    %7 = vector.broadcast %6 : vector<8x1xf32> to vector<8x110xf32>
    %8 = arith.addf %5, %7 : vector<8x110xf32>
    %cst = arith.constant 0.000000e+00 : f32
    %9 = vector.broadcast %cst : f32 to vector<8x110xf32>
    %10 = arith.cmpf ogt, %8, %9 : vector<8x110xf32>
    %cst_8 = arith.constant 1.000000e-01 : f32
    %11 = vector.broadcast %cst_8 : f32 to vector<8x110xf32>
    %12 = arith.mulf %11, %8 : vector<8x110xf32>
    %13 = arith.select %10, %8, %12 : vector<8x110xi1>, vector<8x110xf32>
    %14 = vector.broadcast %0 : vector<1x110xf32> to vector<8x110xf32>
    %15 = arith.mulf %14, %13 : vector<8x110xf32>
    %16 = vector.extract_strided_slice %15 {offsets = [0, 0], sizes = [8, 80], strides = [1, 1]} : vector<8x110xf32> to vector<8x80xf32>
    %17 = vector.extract_strided_slice %15 {offsets = [0, 1], sizes = [8, 80], strides = [1, 1]} : vector<8x110xf32> to vector<8x80xf32>
    %18 = vector.extract_strided_slice %15 {offsets = [0, 2], sizes = [8, 80], strides = [1, 1]} : vector<8x110xf32> to vector<8x80xf32>
    %19 = vector.extract_strided_slice %15 {offsets = [0, 10], sizes = [8, 80], strides = [1, 1]} : vector<8x110xf32> to vector<8x80xf32>
    %20 = vector.extract_strided_slice %15 {offsets = [0, 11], sizes = [8, 80], strides = [1, 1]} : vector<8x110xf32> to vector<8x80xf32>
    %21 = vector.extract_strided_slice %15 {offsets = [0, 12], sizes = [8, 80], strides = [1, 1]} : vector<8x110xf32> to vector<8x80xf32>
    %22 = vector.extract_strided_slice %15 {offsets = [0, 20], sizes = [8, 80], strides = [1, 1]} : vector<8x110xf32> to vector<8x80xf32>
    %23 = vector.extract_strided_slice %15 {offsets = [0, 21], sizes = [8, 80], strides = [1, 1]} : vector<8x110xf32> to vector<8x80xf32>
    %24 = vector.extract_strided_slice %15 {offsets = [0, 22], sizes = [8, 80], strides = [1, 1]} : vector<8x110xf32> to vector<8x80xf32>
    %25 = tpu.concatenate %16, %17, %18, %19, %20, %21, %22, %23, %24 in 0 : vector<8x80xf32>, vector<8x80xf32>, vector<8x80xf32>, vector<8x80xf32>, vector<8x80xf32>, vector<8x80xf32>, vector<8x80xf32>, vector<8x80xf32>, vector<8x80xf32> -> vector<72x80xf32>
    %c0_9 = arith.constant 0 : index
    %c0_10 = arith.constant 0 : index
    %26 = vector.load %arg5[%c0_9, %c0_10] : memref<8x72xf32, #tpu.memory_space<vmem>>, vector<8x72xf32>
    %cst_11 = arith.constant dense<0.000000e+00> : vector<8x80xf32>
    %27 = tpu.matmul %26, %25, %cst_11 {dimension_numbers = #tpu.dot_dimension_numbers<[1], [0], [0], [1], [0, 0, 1, 1], [], []>} : vector<8x72xf32>, vector<72x80xf32>, vector<8x80xf32> -> vector<8x80xf32>
    %c0_12 = arith.constant 0 : index
    %c0_13 = arith.constant 0 : index
    %28 = vector.load %arg6[%c0_12, %c0_13] : memref<8x1xf32, #tpu.memory_space<vmem>>, vector<8x1xf32>
    %29 = vector.broadcast %28 : vector<8x1xf32> to vector<8x80xf32>
    %30 = arith.addf %27, %29 : vector<8x80xf32>
    %c0_14 = arith.constant 0 : index
    %c0_15 = arith.constant 0 : index
    %c0_16 = arith.constant 0 : index
    %31 = vector.load %arg7[%c0_14, %c0_15, %c0_16] : memref<1x8x110xf32, #tpu.memory_space<vmem>>, vector<1x8x110xf32>
    %32 = vector.shape_cast %31 : vector<1x8x110xf32> to vector<8x110xf32>
    %c0_17 = arith.constant 0 : index
    %c0_18 = arith.constant 0 : index
    %33 = vector.load %arg8[%c0_17, %c0_18] : memref<8x1xf32, #tpu.memory_space<vmem>>, vector<8x1xf32>
    %34 = vector.broadcast %33 : vector<8x1xf32> to vector<8x110xf32>
    %35 = arith.mulf %32, %34 : vector<8x110xf32>
    %c0_19 = arith.constant 0 : index
    %c0_20 = arith.constant 0 : index
    %36 = vector.load %arg9[%c0_19, %c0_20] : memref<8x1xf32, #tpu.memory_space<vmem>>, vector<8x1xf32>
    %37 = vector.broadcast %36 : vector<8x1xf32> to vector<8x110xf32>
    %38 = arith.addf %35, %37 : vector<8x110xf32>
    %cst_21 = arith.constant 0.000000e+00 : f32
    %39 = vector.broadcast %cst_21 : f32 to vector<8x110xf32>
    %40 = arith.cmpf ogt, %38, %39 : vector<8x110xf32>
    %cst_22 = arith.constant 1.000000e-01 : f32
    %41 = vector.broadcast %cst_22 : f32 to vector<8x110xf32>
    %42 = arith.mulf %41, %38 : vector<8x110xf32>
    %43 = arith.select %40, %38, %42 : vector<8x110xi1>, vector<8x110xf32>
    %44 = vector.extract_strided_slice %43 {offsets = [0, 11], sizes = [8, 80], strides = [1, 1]} : vector<8x110xf32> to vector<8x80xf32>
    %45 = arith.addf %30, %44 : vector<8x80xf32>
    %c0_23 = arith.constant 0 : index
    %c0_24 = arith.constant 0 : index
    %c0_25 = arith.constant 0 : index
    %46 = vector.load %arg10[%c0_23, %c0_24, %c0_25] : memref<1x8x80xf32, #tpu.memory_space<vmem>>, vector<1x8x80xf32>
    %47 = vector.shape_cast %46 : vector<1x8x80xf32> to vector<8x80xf32>
    %48 = vector.shape_cast %45 : vector<8x80xf32> to vector<1x8x80xf32>
    tpu.vector_store %arg10[%c0_23, %c0_24, %c0_25], %48 {strides = array<i32>} : memref<1x8x80xf32, #tpu.memory_space<vmem>>, vector<1x8x80xf32>,
    return
  }
  func.func @transform_0(%arg0: i32) -> (i32, i32, i32) {
    %c0_i32 = arith.constant 0 : i32
    %c0_i32_0 = arith.constant 0 : i32
    %c0_i32_1 = arith.constant 0 : i32
    return %arg0, %c0_i32, %c0_i32_0 : i32, i32, i32
  }
  func.func @transform_1(%arg0: i32) -> (i32, i32) {
    %c0_i32 = arith.constant 0 : i32
    %c0_i32_0 = arith.constant 0 : i32
    %c0_i32_1 = arith.constant 0 : i32
    return %c0_i32, %c0_i32_0 : i32, i32
  }
  func.func @transform_2(%arg0: i32) -> (i32, i32) {
    %c0_i32 = arith.constant 0 : i32
    %c0_i32_0 = arith.constant 0 : i32
    %c0_i32_1 = arith.constant 0 : i32
    return %c0_i32, %c0_i32_0 : i32, i32
  }
  func.func @transform_3(%arg0: i32) -> (i32, i32) {
    %c0_i32 = arith.constant 0 : i32
    %c0_i32_0 = arith.constant 0 : i32
    %c0_i32_1 = arith.constant 0 : i32
    return %c0_i32, %c0_i32_0 : i32, i32
  }
  func.func @transform_4(%arg0: i32) -> (i32, i32) {
    %c0_i32 = arith.constant 0 : i32
    %c0_i32_0 = arith.constant 0 : i32
    %c0_i32_1 = arith.constant 0 : i32
    return %c0_i32, %c0_i32_0 : i32, i32
  }
  func.func @transform_5(%arg0: i32) -> (i32, i32) {
    %c0_i32 = arith.constant 0 : i32
    %c0_i32_0 = arith.constant 0 : i32
    %c0_i32_1 = arith.constant 0 : i32
    return %c0_i32, %c0_i32_0 : i32, i32
  }
  func.func @transform_6(%arg0: i32) -> (i32, i32, i32) {
    %c0_i32 = arith.constant 0 : i32
    %c0_i32_0 = arith.constant 0 : i32
    %c0_i32_1 = arith.constant 0 : i32
    return %arg0, %c0_i32, %c0_i32_0 : i32, i32, i32
  }
  func.func @transform_7(%arg0: i32) -> (i32, i32) {
    %c0_i32 = arith.constant 0 : i32
    %c0_i32_0 = arith.constant 0 : i32
    %c0_i32_1 = arith.constant 0 : i32
    return %c0_i32, %c0_i32_0 : i32, i32
  }
  func.func @transform_8(%arg0: i32) -> (i32, i32) {
    %c0_i32 = arith.constant 0 : i32
    %c0_i32_0 = arith.constant 0 : i32
    %c0_i32_1 = arith.constant 0 : i32
    return %c0_i32, %c0_i32_0 : i32, i32
  }
  func.func @transform_9(%arg0: i32) -> (i32, i32, i32) {
    %c0_i32 = arith.constant 0 : i32
    %c0_i32_0 = arith.constant 0 : i32
    %c0_i32_1 = arith.constant 0 : i32
    return %arg0, %c0_i32, %c0_i32_0 : i32, i32, i32
  }
}

</mosaic_0001>

<llo_original>
// kernel: conv_group_forward.6
$region0: #{conv_group_forward.6}
  #allocation0 [shape = 'u32[]', space=smem, size = 0x4, offset = 0x4, fixed_abs, tag = 'smem constant byte address 0x4 - core index']
  #allocation1 [shape = 'u32[72,128]{1,0:T(1,128)}', space=vmem, size = 0x9000, scoped, tag = 'internal scratch']
  %s0 = inlined_call_operand.vmem [shape: f32[2,4,256], index: 0, kind: input, shape index: {}]
  %s1 = inlined_call_operand.vmem [shape: f32[4,1], index: 1, kind: input, shape index: {}]
  %s2 = inlined_call_operand.vmem [shape: f32[4,1], index: 2, kind: input, shape index: {}]
  %s3 = inlined_call_operand.vmem [shape: f32[2,4,256], index: 3, kind: output, shape index: {}]
  %s4 = sld [smem:[#allocation0]]
  $region45: #{conv_group_forward.6} parent=0
    _
  %s6 = ssub.s32 1, %s4
  %s7 = scalar_select 0, %s6, %s4
  loop: start=0, step=1, limit=4
  $region2: #{conv_group_forward.6} parent=0 // loop_pre_header
    _
  $region3: #{conv_group_forward.6} parent=0 // loop_header
    %s9 = sphi 0, %s13
    %p10 = scmp.ge.s32.totalorder %s9, 4
    %s19 = sphi 0, %s21
    %s22 = sphi 0, %s19
    %s23 = sphi 0, %s22
    %s39 = sphi 0, %s23
    %s43 = sphi 0, %s43
    %s45 = sphi 0, %s43
    %s46 = sphi 0, %s45
    %s60 = sphi 0, %s46
    %s64 = sphi 0, %s64
    %s66 = sphi 0, %s64
    %s67 = sphi 0, %s66
    %s81 = sphi 0, %s67
    %s87 = sphi 0, %s89
    %s90 = sphi 0, %s87
    %s91 = sphi 0, %s90
    %s107 = sphi 0, %s91
  $region4: #{conv_group_forward.6} parent=0 // loop_header_branch
    %12 = sbr.rel (%p10) target = $region8
  $region5: #{conv_group_forward.6} parent=0 // loop_body
    %s14 = ssub.s32 %s9, 1
    %s15 = ssub.s32 %s9, 2
    %s16 = sadd.s32 %s9, 1
    %s17 = ssub.s32 %s9, %s16
    %p18 = scmp.eq.s32.totalorder %s17, 0
    %s20 = sadd.s32 %s19, 1
    %s21 = scalar_select %p18, %s19, %s20
    %p24 = pneg %p18
    %p25 = scmp.eq.s32.totalorder %s9, 1
    %p26 = por %p24, %p25
    %p27 = scmp.ne.s32.totalorder %s19, %s22
    %p28 = scmp.eq.s32.totalorder %s9, 0
    %p29 = por %p27, %p28
    %p30 = scmp.ne.s32.totalorder %s19, %s22
    %p31 = scmp.eq.s32.totalorder %s14, 1
    %p32 = por %p30, %p31
    %p33 = scmp.ne.s32.totalorder %s22, %s23
    %p34 = scmp.eq.s32.totalorder %s14, 0
    %p35 = por %p33, %p34
    %p36 = scmp.ne.s32.totalorder %s22, %s23
    %p37 = scmp.eq.s32.totalorder %s15, 1
    %p38 = por %p36, %p37
    %p40 = scmp.ne.s32.totalorder %s23, %s39
    %p41 = scmp.eq.s32.totalorder %s15, 0
    %p42 = por %p40, %p41
    %s44 = sadd.s32 %s43, 1
    %p47 = scmp.eq.s32.totalorder %s9, 1
    %p48 = scmp.ne.s32.totalorder %s43, %s45
    %p49 = scmp.eq.s32.totalorder %s9, 0
    %p50 = por %p48, %p49
    %p51 = scmp.ne.s32.totalorder %s43, %s45
    %p52 = scmp.eq.s32.totalorder %s14, 1
    %p53 = por %p51, %p52
    %p54 = scmp.ne.s32.totalorder %s45, %s46
    %p55 = scmp.eq.s32.totalorder %s14, 0
    %p56 = por %p54, %p55
    %p57 = scmp.ne.s32.totalorder %s45, %s46
    %p58 = scmp.eq.s32.totalorder %s15, 1
    %p59 = por %p57, %p58
    %p61 = scmp.ne.s32.totalorder %s46, %s60
    %p62 = scmp.eq.s32.totalorder %s15, 0
    %p63 = por %p61, %p62
    %s65 = sadd.s32 %s64, 1
    %p68 = scmp.eq.s32.totalorder %s9, 1
    %p69 = scmp.ne.s32.totalorder %s64, %s66
    %p70 = scmp.eq.s32.totalorder %s9, 0
    %p71 = por %p69, %p70
    %p72 = scmp.ne.s32.totalorder %s64, %s66
    %p73 = scmp.eq.s32.totalorder %s14, 1
    %p74 = por %p72, %p73
    %p75 = scmp.ne.s32.totalorder %s66, %s67
    %p76 = scmp.eq.s32.totalorder %s14, 0
    %p77 = por %p75, %p76
    %p78 = scmp.ne.s32.totalorder %s66, %s67
    %p79 = scmp.eq.s32.totalorder %s15, 1
    %p80 = por %p78, %p79
    %p82 = scmp.ne.s32.totalorder %s67, %s81
    %p83 = scmp.eq.s32.totalorder %s15, 0
    %p84 = por %p82, %p83
    %s85 = ssub.s32 %s9, %s16
    %p86 = scmp.eq.s32.totalorder %s85, 0
    %s88 = sadd.s32 %s87, 1
    %s89 = scalar_select %p86, %s87, %s88
    %p92 = pneg %p86
    %p93 = scmp.eq.s32.totalorder %s9, 1
    %p94 = por %p92, %p93
    %p95 = scmp.ne.s32.totalorder %s87, %s90
    %p96 = scmp.eq.s32.totalorder %s9, 0
    %p97 = por %p95, %p96
    %p98 = scmp.ne.s32.totalorder %s87, %s90
    %p99 = scmp.eq.s32.totalorder %s14, 1
    %p100 = por %p98, %p99
    %p101 = scmp.ne.s32.totalorder %s90, %s91
    %p102 = scmp.eq.s32.totalorder %s14, 0
    %p103 = por %p101, %p102
    %p104 = scmp.ne.s32.totalorder %s90, %s91
    %p105 = scmp.eq.s32.totalorder %s15, 1
    %p106 = por %p104, %p105
    %p108 = scmp.ne.s32.totalorder %s91, %s107
    %p109 = scmp.eq.s32.totalorder %s15, 0
    %p110 = por %p108, %p109
    %p111 = scmp.le.s32.totalorder 1, %s9
    %p112 = scmp.lt.s32.totalorder %s9, 3
    %p113 = pnand %p111, %p112
    %p114 = pneg %p113
    // Predicated region
    $region9: #{conv_group_forward.6} parent=5 // pred_check
      _
    $region10: #{conv_group_forward.6} parent=5 // pred_check_branch
      %116 = sbr.rel (%p113) target = $region12
    $region11: #{conv_group_forward.6} parent=5 // pred_region
      %s117 = ssub.s32 %s9, 1
      // Predicated region
      $region13: #{conv_group_forward.6} parent=11 // pred_check
        %p118 = pneg %p56
      $region14: #{conv_group_forward.6} parent=11 // pred_check_branch
        %120 = sbr.rel (%p118) target = $region16
      $region15: #{conv_group_forward.6} parent=11 // pred_region
        _
      $region16: #{conv_group_forward.6} parent=11 // pred_fallthru
        _
      // Predicated region
      $region17: #{conv_group_forward.6} parent=11 // pred_check
        %p121 = pneg %p77
      $region18: #{conv_group_forward.6} parent=11 // pred_check_branch
        %123 = sbr.rel (%p121) target = $region20
      $region19: #{conv_group_forward.6} parent=11 // pred_region
        _
      $region20: #{conv_group_forward.6} parent=11 // pred_fallthru
        _
    $region12: #{conv_group_forward.6} parent=5 // pred_fallthru
      _
    %p124 = scmp.lt.s32.totalorder %s9, 2
    // Predicated region
    $region21: #{conv_group_forward.6} parent=5 // pred_check
      %p125 = pneg %p124
    $region22: #{conv_group_forward.6} parent=5 // pred_check_branch
      %127 = sbr.rel (%p125) target = $region24
    $region23: #{conv_group_forward.6} parent=5 // pred_region
      // Predicated region
      $region25: #{conv_group_forward.6} parent=23 // pred_check
        %p128 = pneg %p29
      $region26: #{conv_group_forward.6} parent=23 // pred_check_branch
        %130 = sbr.rel (%p128) target = $region28
      $region27: #{conv_group_forward.6} parent=23 // pred_region
        %p131 = scmp.lt.s32.totalorder %s9, 1
        %s132 = scalar_select %p131, %s9, 1
        %s133 = smul.addr %s132, 2
        %s134 = smul.addr %s133, 4
        %s135 = scalar_lea.vmem %s0, %s134
      $region28: #{conv_group_forward.6} parent=23 // pred_fallthru
        _
    $region24: #{conv_group_forward.6} parent=5 // pred_fallthru
      _
    %p136 = scmp.le.s32.totalorder 1, %s9
    %p137 = scmp.lt.s32.totalorder %s9, 3
    %p138 = pnand %p136, %p137
    %p139 = pneg %p138
    // Predicated region
    $region29: #{conv_group_forward.6} parent=5 // pred_check
      _
    $region30: #{conv_group_forward.6} parent=5 // pred_check_branch
      %141 = sbr.rel (%p138) target = $region32
    $region31: #{conv_group_forward.6} parent=5 // pred_region
      %s142 = ssub.s32 %s9, 1
      %p143 = scmp.lt.s32.totalorder %s14, 1
      %s144 = scalar_select %p143, %s14, 1
      %s145 = smul.addr %s144, 2
      %s146 = smul.addr %s145, 4
      %s147 = scalar_lea.vmem %s0, %s146
      %p148 = pneg %p35
      %p149 = pneg %p32
      %p150 = pneg %p56
      %p151 = pneg %p53
      %p152 = pneg %p77
      %p153 = pneg %p74
      %p154 = pneg %p103
      %p155 = pneg %p100
      %p156 = scmp.lt.s32.totalorder %s14, 1
      %s157 = scalar_select %p156, %s14, 1
      %s158 = smul.addr %s157, 2
      %s159 = smul.addr %s158, 4
      %s160 = scalar_lea.vmem %s3, %s159
      %p161 = scmp.lt.s32.totalorder %s14, 1
      %s162 = scalar_select %p161, %s14, 1
      %s163 = smul.addr %s162, 2
      %s164 = smul.addr %s163, 4
      %s165 = scalar_lea.vmem %s0, %s164
      %p166 = scmp.lt.s32.totalorder %s14, 1
      %s167 = scalar_select %p166, %s14, 1
      %s168 = smul.addr %s167, 2
      %s169 = smul.addr %s168, 4
      %s170 = scalar_lea.vmem %s3, %s169
      %v171 = vld [vmem:[%s165] sm:$0xff]
      %v172 = vld [vmem:[%s1] sm:$0xf]
      %174 = vset.pattern.permute.xlu0 0
      %175 = vperm.xlu0 %174, %v172
      %v176 = vpop.permute.xlu0 %175
      %v178 = vunpack.c.l.s4 839922192
      %v179 = vunpack.c.0.s8 %v178
      %v180 = vperm.slane %v176, %v179
      %v182 = vmul.f32 %v171, %v180
      %v183 = vld [vmem:[%s2] sm:$0xf]
      %185 = vset.pattern.permute.xlu0 0
      %186 = vperm.xlu0 %185, %v183
      %v187 = vpop.permute.xlu0 %186
      %v189 = vunpack.c.l.s4 839922192
      %v190 = vunpack.c.0.s8 %v189
      %v191 = vperm.slane %v187, %v190
      %v193 = vadd.f32 %v182, %v191
      %vm194 = vcmp.gt.f32.partialorder %v193, 0.0
      %v195 = vmul.f32 %v193, 0.1
      %v196 = vsel %vm194, %v193, %v195
      %197 = vst [vmem:[%s170] sm:$0xff] %v196
      %p198 = scmp.lt.s32.totalorder %s14, 1
      %s199 = scalar_select %p198, %s14, 1
      %s200 = smul.addr %s199, 2
      %s201 = smul.addr %s200, 4
      %s202 = scalar_lea.vmem %s3, %s201
      // Predicated region
      $region33: #{conv_group_forward.6} parent=31 // pred_check
        %p203 = pneg %p100
      $region34: #{conv_group_forward.6} parent=31 // pred_check_branch
        %205 = sbr.rel (%p203) target = $region36
      $region35: #{conv_group_forward.6} parent=31 // pred_region
        _
      $region36: #{conv_group_forward.6} parent=31 // pred_fallthru
        _
    $region32: #{conv_group_forward.6} parent=5 // pred_fallthru
      _
    %p206 = scmp.le.s32.totalorder 2, %s9
    // Predicated region
    $region37: #{conv_group_forward.6} parent=5 // pred_check
      %p207 = pneg %p206
    $region38: #{conv_group_forward.6} parent=5 // pred_check_branch
      %209 = sbr.rel (%p207) target = $region40
    $region39: #{conv_group_forward.6} parent=5 // pred_region
      %s210 = ssub.s32 %s9, 2
      // Predicated region
      $region41: #{conv_group_forward.6} parent=39 // pred_check
        %p211 = pneg %p106
      $region42: #{conv_group_forward.6} parent=39 // pred_check_branch
        %213 = sbr.rel (%p211) target = $region44
      $region43: #{conv_group_forward.6} parent=39 // pred_region
        %p214 = scmp.lt.s32.totalorder %s15, 1
        %s215 = scalar_select %p214, %s15, 1
        %s216 = smul.addr %s215, 2
        %s217 = smul.addr %s216, 4
        %s218 = scalar_lea.vmem %s3, %s217
      $region44: #{conv_group_forward.6} parent=39 // pred_fallthru
        _
    $region40: #{conv_group_forward.6} parent=5 // pred_fallthru
      _
  $region6: #{conv_group_forward.6} parent=0 // loop_footer
    %s13 = sadd.s32 1, %s9
  $region7: #{conv_group_forward.6} parent=0 // loop_footer_branch
    %8 = sbr.rel target = $region3
  $region8: #{conv_group_forward.6} parent=0 // loop_exit
    _

// kernel: conv_group_forward.7
$region0: #{conv_group_forward.7}
  #allocation0 [shape = 'u32[]', space=smem, size = 0x4, offset = 0x4, fixed_abs, tag = 'smem constant byte address 0x4 - core index']
  #allocation1 [shape = 'u32[72,128]{1,0:T(1,128)}', space=vmem, size = 0x9000, scoped, tag = 'internal scratch']
  %s0 = inlined_call_operand.vmem [shape: f32[2,36,64], index: 0, kind: input, shape index: {}]
  %s1 = inlined_call_operand.vmem [shape: f32[8,36], index: 1, kind: input, shape index: {}]
  %s2 = inlined_call_operand.vmem [shape: f32[8,1], index: 2, kind: input, shape index: {}]
  %s3 = inlined_call_operand.vmem [shape: f32[2,8,64], index: 3, kind: output, shape index: {}]
  %s4 = sld [smem:[#allocation0]]
  $region45: #{conv_group_forward.7} parent=0
    _
  %s6 = ssub.s32 1, %s4
  %s7 = scalar_select 0, %s6, %s4
  loop: start=0, step=1, limit=4
  $region2: #{conv_group_forward.7} parent=0 // loop_pre_header
    _
  $region3: #{conv_group_forward.7} parent=0 // loop_header
    %s9 = sphi 0, %s13
    %p10 = scmp.ge.s32.totalorder %s9, 4
    %s19 = sphi 0, %s21
    %s22 = sphi 0, %s19
    %s23 = sphi 0, %s22
    %s39 = sphi 0, %s23
    %s43 = sphi 0, %s43
    %s45 = sphi 0, %s43
    %s46 = sphi 0, %s45
    %s60 = sphi 0, %s46
    %s64 = sphi 0, %s64
    %s66 = sphi 0, %s64
    %s67 = sphi 0, %s66
    %s81 = sphi 0, %s67
    %s87 = sphi 0, %s89
    %s90 = sphi 0, %s87
    %s91 = sphi 0, %s90
    %s107 = sphi 0, %s91
  $region4: #{conv_group_forward.7} parent=0 // loop_header_branch
    %12 = sbr.rel (%p10) target = $region8
  $region5: #{conv_group_forward.7} parent=0 // loop_body
    %s14 = ssub.s32 %s9, 1
    %s15 = ssub.s32 %s9, 2
    %s16 = sadd.s32 %s9, 1
    %s17 = ssub.s32 %s9, %s16
    %p18 = scmp.eq.s32.totalorder %s17, 0
    %s20 = sadd.s32 %s19, 1
    %s21 = scalar_select %p18, %s19, %s20
    %p24 = pneg %p18
    %p25 = scmp.eq.s32.totalorder %s9, 1
    %p26 = por %p24, %p25
    %p27 = scmp.ne.s32.totalorder %s19, %s22
    %p28 = scmp.eq.s32.totalorder %s9, 0
    %p29 = por %p27, %p28
    %p30 = scmp.ne.s32.totalorder %s19, %s22
    %p31 = scmp.eq.s32.totalorder %s14, 1
    %p32 = por %p30, %p31
    %p33 = scmp.ne.s32.totalorder %s22, %s23
    %p34 = scmp.eq.s32.totalorder %s14, 0
    %p35 = por %p33, %p34
    %p36 = scmp.ne.s32.totalorder %s22, %s23
    %p37 = scmp.eq.s32.totalorder %s15, 1
    %p38 = por %p36, %p37
    %p40 = scmp.ne.s32.totalorder %s23, %s39
    %p41 = scmp.eq.s32.totalorder %s15, 0
    %p42 = por %p40, %p41
    %s44 = sadd.s32 %s43, 1
    %p47 = scmp.eq.s32.totalorder %s9, 1
    %p48 = scmp.ne.s32.totalorder %s43, %s45
    %p49 = scmp.eq.s32.totalorder %s9, 0
    %p50 = por %p48, %p49
    %p51 = scmp.ne.s32.totalorder %s43, %s45
    %p52 = scmp.eq.s32.totalorder %s14, 1
    %p53 = por %p51, %p52
    %p54 = scmp.ne.s32.totalorder %s45, %s46
    %p55 = scmp.eq.s32.totalorder %s14, 0
    %p56 = por %p54, %p55
    %p57 = scmp.ne.s32.totalorder %s45, %s46
    %p58 = scmp.eq.s32.totalorder %s15, 1
    %p59 = por %p57, %p58
    %p61 = scmp.ne.s32.totalorder %s46, %s60
    %p62 = scmp.eq.s32.totalorder %s15, 0
    %p63 = por %p61, %p62
    %s65 = sadd.s32 %s64, 1
    %p68 = scmp.eq.s32.totalorder %s9, 1
    %p69 = scmp.ne.s32.totalorder %s64, %s66
    %p70 = scmp.eq.s32.totalorder %s9, 0
    %p71 = por %p69, %p70
    %p72 = scmp.ne.s32.totalorder %s64, %s66
    %p73 = scmp.eq.s32.totalorder %s14, 1
    %p74 = por %p72, %p73
    %p75 = scmp.ne.s32.totalorder %s66, %s67
    %p76 = scmp.eq.s32.totalorder %s14, 0
    %p77 = por %p75, %p76
    %p78 = scmp.ne.s32.totalorder %s66, %s67
    %p79 = scmp.eq.s32.totalorder %s15, 1
    %p80 = por %p78, %p79
    %p82 = scmp.ne.s32.totalorder %s67, %s81
    %p83 = scmp.eq.s32.totalorder %s15, 0
    %p84 = por %p82, %p83
    %s85 = ssub.s32 %s9, %s16
    %p86 = scmp.eq.s32.totalorder %s85, 0
    %s88 = sadd.s32 %s87, 1
    %s89 = scalar_select %p86, %s87, %s88
    %p92 = pneg %p86
    %p93 = scmp.eq.s32.totalorder %s9, 1
    %p94 = por %p92, %p93
    %p95 = scmp.ne.s32.totalorder %s87, %s90
    %p96 = scmp.eq.s32.totalorder %s9, 0
    %p97 = por %p95, %p96
    %p98 = scmp.ne.s32.totalorder %s87, %s90
    %p99 = scmp.eq.s32.totalorder %s14, 1
    %p100 = por %p98, %p99
    %p101 = scmp.ne.s32.totalorder %s90, %s91
    %p102 = scmp.eq.s32.totalorder %s14, 0
    %p103 = por %p101, %p102
    %p104 = scmp.ne.s32.totalorder %s90, %s91
    %p105 = scmp.eq.s32.totalorder %s15, 1
    %p106 = por %p104, %p105
    %p108 = scmp.ne.s32.totalorder %s91, %s107
    %p109 = scmp.eq.s32.totalorder %s15, 0
    %p110 = por %p108, %p109
    %p111 = scmp.le.s32.totalorder 1, %s9
    %p112 = scmp.lt.s32.totalorder %s9, 3
    %p113 = pnand %p111, %p112
    %p114 = pneg %p113
    // Predicated region
    $region9: #{conv_group_forward.7} parent=5 // pred_check
      _
    $region10: #{conv_group_forward.7} parent=5 // pred_check_branch
      %116 = sbr.rel (%p113) target = $region12
    $region11: #{conv_group_forward.7} parent=5 // pred_region
      %s117 = ssub.s32 %s9, 1
      // Predicated region
      $region13: #{conv_group_forward.7} parent=11 // pred_check
        %p118 = pneg %p56
      $region14: #{conv_group_forward.7} parent=11 // pred_check_branch
        %120 = sbr.rel (%p118) target = $region16
      $region15: #{conv_group_forward.7} parent=11 // pred_region
        _
      $region16: #{conv_group_forward.7} parent=11 // pred_fallthru
        _
      // Predicated region
      $region17: #{conv_group_forward.7} parent=11 // pred_check
        %p121 = pneg %p77
      $region18: #{conv_group_forward.7} parent=11 // pred_check_branch
        %123 = sbr.rel (%p121) target = $region20
      $region19: #{conv_group_forward.7} parent=11 // pred_region
        _
      $region20: #{conv_group_forward.7} parent=11 // pred_fallthru
        _
    $region12: #{conv_group_forward.7} parent=5 // pred_fallthru
      _
    %p124 = scmp.lt.s32.totalorder %s9, 2
    // Predicated region
    $region21: #{conv_group_forward.7} parent=5 // pred_check
      %p125 = pneg %p124
    $region22: #{conv_group_forward.7} parent=5 // pred_check_branch
      %127 = sbr.rel (%p125) target = $region24
    $region23: #{conv_group_forward.7} parent=5 // pred_region
      // Predicated region
      $region25: #{conv_group_forward.7} parent=23 // pred_check
        %p128 = pneg %p29
      $region26: #{conv_group_forward.7} parent=23 // pred_check_branch
        %130 = sbr.rel (%p128) target = $region28
      $region27: #{conv_group_forward.7} parent=23 // pred_region
        %p131 = scmp.lt.s32.totalorder %s9, 1
        %s132 = scalar_select %p131, %s9, 1
        %s133 = smul.addr %s132, 5
        %s134 = smul.addr %s133, 8
        %s135 = scalar_lea.vmem %s0, %s134
      $region28: #{conv_group_forward.7} parent=23 // pred_fallthru
        _
    $region24: #{conv_group_forward.7} parent=5 // pred_fallthru
      _
    %p136 = scmp.le.s32.totalorder 1, %s9
    %p137 = scmp.lt.s32.totalorder %s9, 3
    %p138 = pnand %p136, %p137
    %p139 = pneg %p138
    // Predicated region
    $region29: #{conv_group_forward.7} parent=5 // pred_check
      _
    $region30: #{conv_group_forward.7} parent=5 // pred_check_branch
      %141 = sbr.rel (%p138) target = $region32
    $region31: #{conv_group_forward.7} parent=5 // pred_region
      %s142 = ssub.s32 %s9, 1
      %p143 = scmp.lt.s32.totalorder %s14, 1
      %s144 = scalar_select %p143, %s14, 1
      %s145 = smul.addr %s144, 5
      %s146 = smul.addr %s145, 8
      %s147 = scalar_lea.vmem %s0, %s146
      %p148 = pneg %p35
      %p149 = pneg %p32
      %p150 = pneg %p56
      %p151 = pneg %p53
      %p152 = pneg %p77
      %p153 = pneg %p74
      %p154 = pneg %p103
      %p155 = pneg %p100
      %p156 = scmp.lt.s32.totalorder %s14, 1
      %s157 = scalar_select %p156, %s14, 1
      %s158 = smul.addr %s157, 8
      %s159 = scalar_lea.vmem %s3, %s158
      %p160 = scmp.lt.s32.totalorder %s14, 1
      %s161 = scalar_select %p160, %s14, 1
      %s162 = smul.addr %s161, 5
      %s163 = smul.addr %s162, 8
      %s164 = scalar_lea.vmem %s0, %s163
      %p165 = scmp.lt.s32.totalorder %s14, 1
      %s166 = scalar_select %p165, %s14, 1
      %s167 = smul.addr %s166, 8
      %s168 = scalar_lea.vmem %s3, %s167
      %v169 = vld [vmem:[%s1] sm:$0xff]
      %v170 = vld [vmem:[%s164] sm:$0xff]
      %v171 = vld [vmem:[%s164 + $0x8] sm:$0xff]
      %v172 = vld [vmem:[%s164 + $0x10] sm:$0xff]
      %v173 = vld [vmem:[%s164 + $0x18] sm:$0xff]
      %v174 = vld [vmem:[%s164 + $0x20] sm:$0xf]
      %v175 = vld [vmem:[%s2] sm:$0xff]
      %177 = vset.pattern.permute.xlu0 0
      %178 = vperm.xlu0 %177, %v175
      %v179 = vpop.permute.xlu0 %178
      %vm181 = vcmask 293888
      %v183 = vsel %vm181, %v169, 0
      %vm185 = vcmask 1043456
      %v187 = vsel %vm185, %v174, 0
      %189 = vmatpush.msra.mxu0 0.0
      %190 = vmatpush.msra.mxu0 0.0
      %191 = vmatpush.msra.mxu0 0.0
      %192 = vmatpush.msra.mxu0 0.0
      %193 = vmatpush.msra.mxu0 0.0
      %194 = vmatpush.msra.mxu0 0.0
      %195 = vmatpush.msra.mxu0 0.0
      %196 = vmatpush.msra.mxu0 0.0
      %197 = vmatpush.msra.mxu0 0.0
      %198 = vmatpush.msra.mxu0 0.0
      %199 = vmatpush.msra.mxu0 0.0
      %200 = vmatpush.msra.mxu0 %v187
      %201 = vmatpush.msra.mxu0 %v173
      %202 = vmatpush.msra.mxu0 %v172
      %203 = vmatpush.msra.mxu0 %v171
      %204 = vmatpush.msra.mxu0 %v170
      %205 = vmatmul.f32.gmra.mxu0 %v183
      %v206 = vpop.f32.mrf.mxu0
      %v207 = vadd.f32 %v179, %v206
      %208 = vdwg.mxu0
      %vm209 = vcmask 523264
      %210 = vst.msk [vmem:[%s168] sm:$0xff] %vm209, %v207
      %p211 = scmp.lt.s32.totalorder %s14, 1
      %s212 = scalar_select %p211, %s14, 1
      %s213 = smul.addr %s212, 8
      %s214 = scalar_lea.vmem %s3, %s213
      // Predicated region
      $region33: #{conv_group_forward.7} parent=31 // pred_check
        %p215 = pneg %p100
      $region34: #{conv_group_forward.7} parent=31 // pred_check_branch
        %217 = sbr.rel (%p215) target = $region36
      $region35: #{conv_group_forward.7} parent=31 // pred_region
        _
      $region36: #{conv_group_forward.7} parent=31 // pred_fallthru
        _
    $region32: #{conv_group_forward.7} parent=5 // pred_fallthru
      _
    %p218 = scmp.le.s32.totalorder 2, %s9
    // Predicated region
    $region37: #{conv_group_forward.7} parent=5 // pred_check
      %p219 = pneg %p218
    $region38: #{conv_group_forward.7} parent=5 // pred_check_branch
      %221 = sbr.rel (%p219) target = $region40
    $region39: #{conv_group_forward.7} parent=5 // pred_region
      %s222 = ssub.s32 %s9, 2
      // Predicated region
      $region41: #{conv_group_forward.7} parent=39 // pred_check
        %p223 = pneg %p106
      $region42: #{conv_group_forward.7} parent=39 // pred_check_branch
        %225 = sbr.rel (%p223) target = $region44
      $region43: #{conv_group_forward.7} parent=39 // pred_region
        %p226 = scmp.lt.s32.totalorder %s15, 1
        %s227 = scalar_select %p226, %s15, 1
        %s228 = smul.addr %s227, 8
        %s229 = scalar_lea.vmem %s3, %s228
      $region44: #{conv_group_forward.7} parent=39 // pred_fallthru
        _
    $region40: #{conv_group_forward.7} parent=5 // pred_fallthru
      _
  $region6: #{conv_group_forward.7} parent=0 // loop_footer
    %s13 = sadd.s32 1, %s9
  $region7: #{conv_group_forward.7} parent=0 // loop_footer_branch
    %8 = sbr.rel target = $region3
  $region8: #{conv_group_forward.7} parent=0 // loop_exit
    _

// kernel: conv_group_forward.9
$region0: #{conv_group_forward.9}
  #allocation0 [shape = 'u32[]', space=smem, size = 0x4, offset = 0x4, fixed_abs, tag = 'smem constant byte address 0x4 - core index']
  #allocation1 [shape = 'u32[72,128]{1,0:T(1,128)}', space=vmem, size = 0x9000, scoped, tag = 'internal scratch']
  %s0 = inlined_call_operand.vmem [shape: f32[2,8,110], index: 0, kind: input, shape index: {}]
  %s1 = inlined_call_operand.vmem [shape: f32[8,1], index: 1, kind: input, shape index: {}]
  %s2 = inlined_call_operand.vmem [shape: f32[8,1], index: 2, kind: input, shape index: {}]
  %s3 = inlined_call_operand.vmem [shape: f32[1,110], index: 3, kind: input, shape index: {}]
  %s4 = inlined_call_operand.vmem [shape: f32[8,72], index: 4, kind: input, shape index: {}]
  %s5 = inlined_call_operand.vmem [shape: f32[8,1], index: 5, kind: input, shape index: {}]
  %s6 = inlined_call_operand.vmem [shape: f32[2,8,80], index: 6, kind: output, shape index: {}]
  %s7 = sld [smem:[#allocation0]]
  $region57: #{conv_group_forward.9} parent=0
    _
  %s9 = ssub.s32 1, %s7
  %s10 = scalar_select 0, %s9, %s7
  loop: start=0, step=1, limit=4
  $region2: #{conv_group_forward.9} parent=0 // loop_pre_header
    _
  $region3: #{conv_group_forward.9} parent=0 // loop_header
    %s12 = sphi 0, %s16
    %p13 = scmp.ge.s32.totalorder %s12, 4
    %s22 = sphi 0, %s24
    %s25 = sphi 0, %s22
    %s26 = sphi 0, %s25
    %s42 = sphi 0, %s26
    %s46 = sphi 0, %s46
    %s48 = sphi 0, %s46
    %s49 = sphi 0, %s48
    %s63 = sphi 0, %s49
    %s67 = sphi 0, %s67
    %s69 = sphi 0, %s67
    %s70 = sphi 0, %s69
    %s84 = sphi 0, %s70
    %s88 = sphi 0, %s88
    %s90 = sphi 0, %s88
    %s91 = sphi 0, %s90
    %s105 = sphi 0, %s91
    %s109 = sphi 0, %s109
    %s111 = sphi 0, %s109
    %s112 = sphi 0, %s111
    %s126 = sphi 0, %s112
    %s130 = sphi 0, %s130
    %s132 = sphi 0, %s130
    %s133 = sphi 0, %s132
    %s147 = sphi 0, %s133
    %s153 = sphi 0, %s155
    %s156 = sphi 0, %s153
    %s157 = sphi 0, %s156
    %s173 = sphi 0, %s157
  $region4: #{conv_group_forward.9} parent=0 // loop_header_branch
    %15 = sbr.rel (%p13) target = $region8
  $region5: #{conv_group_forward.9} parent=0 // loop_body
    %s17 = ssub.s32 %s12, 1
    %s18 = ssub.s32 %s12, 2
    %s19 = sadd.s32 %s12, 1
    %s20 = ssub.s32 %s12, %s19
    %p21 = scmp.eq.s32.totalorder %s20, 0
    %s23 = sadd.s32 %s22, 1
    %s24 = scalar_select %p21, %s22, %s23
    %p27 = pneg %p21
    %p28 = scmp.eq.s32.totalorder %s12, 1
    %p29 = por %p27, %p28
    %p30 = scmp.ne.s32.totalorder %s22, %s25
    %p31 = scmp.eq.s32.totalorder %s12, 0
    %p32 = por %p30, %p31
    %p33 = scmp.ne.s32.totalorder %s22, %s25
    %p34 = scmp.eq.s32.totalorder %s17, 1
    %p35 = por %p33, %p34
    %p36 = scmp.ne.s32.totalorder %s25, %s26
    %p37 = scmp.eq.s32.totalorder %s17, 0
    %p38 = por %p36, %p37
    %p39 = scmp.ne.s32.totalorder %s25, %s26
    %p40 = scmp.eq.s32.totalorder %s18, 1
    %p41 = por %p39, %p40
    %p43 = scmp.ne.s32.totalorder %s26, %s42
    %p44 = scmp.eq.s32.totalorder %s18, 0
    %p45 = por %p43, %p44
    %s47 = sadd.s32 %s46, 1
    %p50 = scmp.eq.s32.totalorder %s12, 1
    %p51 = scmp.ne.s32.totalorder %s46, %s48
    %p52 = scmp.eq.s32.totalorder %s12, 0
    %p53 = por %p51, %p52
    %p54 = scmp.ne.s32.totalorder %s46, %s48
    %p55 = scmp.eq.s32.totalorder %s17, 1
    %p56 = por %p54, %p55
    %p57 = scmp.ne.s32.totalorder %s48, %s49
    %p58 = scmp.eq.s32.totalorder %s17, 0
    %p59 = por %p57, %p58
    %p60 = scmp.ne.s32.totalorder %s48, %s49
    %p61 = scmp.eq.s32.totalorder %s18, 1
    %p62 = por %p60, %p61
    %p64 = scmp.ne.s32.totalorder %s49, %s63
    %p65 = scmp.eq.s32.totalorder %s18, 0
    %p66 = por %p64, %p65
    %s68 = sadd.s32 %s67, 1
    %p71 = scmp.eq.s32.totalorder %s12, 1
    %p72 = scmp.ne.s32.totalorder %s67, %s69
    %p73 = scmp.eq.s32.totalorder %s12, 0
    %p74 = por %p72, %p73
    %p75 = scmp.ne.s32.totalorder %s67, %s69
    %p76 = scmp.eq.s32.totalorder %s17, 1
    %p77 = por %p75, %p76
    %p78 = scmp.ne.s32.totalorder %s69, %s70
    %p79 = scmp.eq.s32.totalorder %s17, 0
    %p80 = por %p78, %p79
    %p81 = scmp.ne.s32.totalorder %s69, %s70
    %p82 = scmp.eq.s32.totalorder %s18, 1
    %p83 = por %p81, %p82
    %p85 = scmp.ne.s32.totalorder %s70, %s84
    %p86 = scmp.eq.s32.totalorder %s18, 0
    %p87 = por %p85, %p86
    %s89 = sadd.s32 %s88, 1
    %p92 = scmp.eq.s32.totalorder %s12, 1
    %p93 = scmp.ne.s32.totalorder %s88, %s90
    %p94 = scmp.eq.s32.totalorder %s12, 0
    %p95 = por %p93, %p94
    %p96 = scmp.ne.s32.totalorder %s88, %s90
    %p97 = scmp.eq.s32.totalorder %s17, 1
    %p98 = por %p96, %p97
    %p99 = scmp.ne.s32.totalorder %s90, %s91
    %p100 = scmp.eq.s32.totalorder %s17, 0
    %p101 = por %p99, %p100
    %p102 = scmp.ne.s32.totalorder %s90, %s91
    %p103 = scmp.eq.s32.totalorder %s18, 1
    %p104 = por %p102, %p103
    %p106 = scmp.ne.s32.totalorder %s91, %s105
    %p107 = scmp.eq.s32.totalorder %s18, 0
    %p108 = por %p106, %p107
    %s110 = sadd.s32 %s109, 1
    %p113 = scmp.eq.s32.totalorder %s12, 1
    %p114 = scmp.ne.s32.totalorder %s109, %s111
    %p115 = scmp.eq.s32.totalorder %s12, 0
    %p116 = por %p114, %p115
    %p117 = scmp.ne.s32.totalorder %s109, %s111
    %p118 = scmp.eq.s32.totalorder %s17, 1
    %p119 = por %p117, %p118
    %p120 = scmp.ne.s32.totalorder %s111, %s112
    %p121 = scmp.eq.s32.totalorder %s17, 0
    %p122 = por %p120, %p121
    %p123 = scmp.ne.s32.totalorder %s111, %s112
    %p124 = scmp.eq.s32.totalorder %s18, 1
    %p125 = por %p123, %p124
    %p127 = scmp.ne.s32.totalorder %s112, %s126
    %p128 = scmp.eq.s32.totalorder %s18, 0
    %p129 = por %p127, %p128
    %s131 = sadd.s32 %s130, 1
    %p134 = scmp.eq.s32.totalorder %s12, 1
    %p135 = scmp.ne.s32.totalorder %s130, %s132
    %p136 = scmp.eq.s32.totalorder %s12, 0
    %p137 = por %p135, %p136
    %p138 = scmp.ne.s32.totalorder %s130, %s132
    %p139 = scmp.eq.s32.totalorder %s17, 1
    %p140 = por %p138, %p139
    %p141 = scmp.ne.s32.totalorder %s132, %s133
    %p142 = scmp.eq.s32.totalorder %s17, 0
    %p143 = por %p141, %p142
    %p144 = scmp.ne.s32.totalorder %s132, %s133
    %p145 = scmp.eq.s32.totalorder %s18, 1
    %p146 = por %p144, %p145
    %p148 = scmp.ne.s32.totalorder %s133, %s147
    %p149 = scmp.eq.s32.totalorder %s18, 0
    %p150 = por %p148, %p149
    %s151 = ssub.s32 %s12, %s19
    %p152 = scmp.eq.s32.totalorder %s151, 0
    %s154 = sadd.s32 %s153, 1
    %s155 = scalar_select %p152, %s153, %s154
    %p158 = pneg %p152
    %p159 = scmp.eq.s32.totalorder %s12, 1
    %p160 = por %p158, %p159
    %p161 = scmp.ne.s32.totalorder %s153, %s156
    %p162 = scmp.eq.s32.totalorder %s12, 0
    %p163 = por %p161, %p162
    %p164 = scmp.ne.s32.totalorder %s153, %s156
    %p165 = scmp.eq.s32.totalorder %s17, 1
    %p166 = por %p164, %p165
    %p167 = scmp.ne.s32.totalorder %s156, %s157
    %p168 = scmp.eq.s32.totalorder %s17, 0
    %p169 = por %p167, %p168
    %p170 = scmp.ne.s32.totalorder %s156, %s157
    %p171 = scmp.eq.s32.totalorder %s18, 1
    %p172 = por %p170, %p171
    %p174 = scmp.ne.s32.totalorder %s157, %s173
    %p175 = scmp.eq.s32.totalorder %s18, 0
    %p176 = por %p174, %p175
    %p177 = scmp.le.s32.totalorder 1, %s12
    %p178 = scmp.lt.s32.totalorder %s12, 3
    %p179 = pnand %p177, %p178
    %p180 = pneg %p179
    // Predicated region
    $region9: #{conv_group_forward.9} parent=5 // pred_check
      _
    $region10: #{conv_group_forward.9} parent=5 // pred_check_branch
      %182 = sbr.rel (%p179) target = $region12
    $region11: #{conv_group_forward.9} parent=5 // pred_region
      %s183 = ssub.s32 %s12, 1
      // Predicated region
      $region13: #{conv_group_forward.9} parent=11 // pred_check
        %p184 = pneg %p59
      $region14: #{conv_group_forward.9} parent=11 // pred_check_branch
        %186 = sbr.rel (%p184) target = $region16
      $region15: #{conv_group_forward.9} parent=11 // pred_region
        _
      $region16: #{conv_group_forward.9} parent=11 // pred_fallthru
        _
      // Predicated region
      $region17: #{conv_group_forward.9} parent=11 // pred_check
        %p187 = pneg %p80
      $region18: #{conv_group_forward.9} parent=11 // pred_check_branch
        %189 = sbr.rel (%p187) target = $region20
      $region19: #{conv_group_forward.9} parent=11 // pred_region
        _
      $region20: #{conv_group_forward.9} parent=11 // pred_fallthru
        _
      // Predicated region
      $region21: #{conv_group_forward.9} parent=11 // pred_check
        %p190 = pneg %p101
      $region22: #{conv_group_forward.9} parent=11 // pred_check_branch
        %192 = sbr.rel (%p190) target = $region24
      $region23: #{conv_group_forward.9} parent=11 // pred_region
        _
      $region24: #{conv_group_forward.9} parent=11 // pred_fallthru
        _
      // Predicated region
      $region25: #{conv_group_forward.9} parent=11 // pred_check
        %p193 = pneg %p122
      $region26: #{conv_group_forward.9} parent=11 // pred_check_branch
        %195 = sbr.rel (%p193) target = $region28
      $region27: #{conv_group_forward.9} parent=11 // pred_region
        _
      $region28: #{conv_group_forward.9} parent=11 // pred_fallthru
        _
      // Predicated region
      $region29: #{conv_group_forward.9} parent=11 // pred_check
        %p196 = pneg %p143
      $region30: #{conv_group_forward.9} parent=11 // pred_check_branch
        %198 = sbr.rel (%p196) target = $region32
      $region31: #{conv_group_forward.9} parent=11 // pred_region
        _
      $region32: #{conv_group_forward.9} parent=11 // pred_fallthru
        _
    $region12: #{conv_group_forward.9} parent=5 // pred_fallthru
      _
    %p199 = scmp.lt.s32.totalorder %s12, 2
    // Predicated region
    $region33: #{conv_group_forward.9} parent=5 // pred_check
      %p200 = pneg %p199
    $region34: #{conv_group_forward.9} parent=5 // pred_check_branch
      %202 = sbr.rel (%p200) target = $region36
    $region35: #{conv_group_forward.9} parent=5 // pred_region
      // Predicated region
      $region37: #{conv_group_forward.9} parent=35 // pred_check
        %p203 = pneg %p32
      $region38: #{conv_group_forward.9} parent=35 // pred_check_branch
        %205 = sbr.rel (%p203) target = $region40
      $region39: #{conv_group_forward.9} parent=35 // pred_region
        %p206 = scmp.lt.s32.totalorder %s12, 1
        %s207 = scalar_select %p206, %s12, 1
        %s208 = smul.addr %s207, 8
        %s209 = scalar_lea.vmem %s0, %s208
      $region40: #{conv_group_forward.9} parent=35 // pred_fallthru
        _
    $region36: #{conv_group_forward.9} parent=5 // pred_fallthru
      _
    %p210 = scmp.le.s32.totalorder 1, %s12
    %p211 = scmp.lt.s32.totalorder %s12, 3
    %p212 = pnand %p210, %p211
    %p213 = pneg %p212
    // Predicated region
    $region41: #{conv_group_forward.9} parent=5 // pred_check
      _
    $region42: #{conv_group_forward.9} parent=5 // pred_check_branch
      %215 = sbr.rel (%p212) target = $region44
    $region43: #{conv_group_forward.9} parent=5 // pred_region
      %s216 = ssub.s32 %s12, 1
      %p217 = scmp.lt.s32.totalorder %s17, 1
      %s218 = scalar_select %p217, %s17, 1
      %s219 = smul.addr %s218, 8
      %s220 = scalar_lea.vmem %s0, %s219
      %p221 = pneg %p38
      %p222 = pneg %p35
      %p223 = pneg %p59
      %p224 = pneg %p56
      %p225 = pneg %p80
      %p226 = pneg %p77
      %p227 = pneg %p101
      %p228 = pneg %p98
      %p229 = pneg %p122
      %p230 = pneg %p119
      %p231 = pneg %p143
      %p232 = pneg %p140
      %p233 = pneg %p169
      %p234 = pneg %p166
      %p235 = scmp.lt.s32.totalorder %s17, 1
      %s236 = scalar_select %p235, %s17, 1
      %s237 = smul.addr %s236, 8
      %s238 = scalar_lea.vmem %s6, %s237
      %p239 = scmp.lt.s32.totalorder %s17, 1
      %s240 = scalar_select %p239, %s17, 1
      %s241 = smul.addr %s240, 8
      %s242 = scalar_lea.vmem %s0, %s241
      %p243 = scmp.lt.s32.totalorder %s17, 1
      %s244 = scalar_select %p243, %s17, 1
      %s245 = smul.addr %s244, 8
      %s246 = scalar_lea.vmem %s6, %s245
      %v247 = vld [vmem:[%s3] sm:$0x1]
      %v248 = vld [vmem:[%s242] sm:$0xff]
      %v249 = vld [vmem:[%s1] sm:$0xff]
      %251 = vset.pattern.permute.xlu0 0
      %252 = vperm.xlu0 %251, %v249
      %v253 = vpop.permute.xlu0 %252
      %v255 = vmul.f32 %v248, %v253
      %v256 = vld [vmem:[%s2] sm:$0xff]
      %258 = vset.pattern.permute.xlu0 0
      %259 = vperm.xlu0 %258, %v256
      %v260 = vpop.permute.xlu0 %259
      %v262 = vadd.f32 %v255, %v260
      %vm263 = vcmp.gt.f32.partialorder %v262, 0.0
      %v264 = vmul.f32 %v262, 0.1
      %v265 = vsel %vm263, %v262, %v264
      %v267 = vperm.slane %v247, 0
      %v269 = vmul.f32 %v267, %v265
      %271 = vrot.lane.b32.xlu0 %v269, 127
      %v272 = vpop.permute.xlu0 %271
      %274 = vrot.lane.b32.xlu0 %v269, 126
      %v275 = vpop.permute.xlu0 %274
      %277 = vrot.lane.b32.xlu0 %v269, 118
      %v278 = vpop.permute.xlu0 %277
      %280 = vrot.lane.b32.xlu0 %v269, 117
      %v281 = vpop.permute.xlu0 %280
      %283 = vrot.lane.b32.xlu0 %v269, 116
      %v284 = vpop.permute.xlu0 %283
      %286 = vrot.lane.b32.xlu0 %v269, 108
      %v287 = vpop.permute.xlu0 %286
      %289 = vrot.lane.b32.xlu0 %v269, 107
      %v290 = vpop.permute.xlu0 %289
      %292 = vrot.lane.b32.xlu0 %v269, 106
      %v293 = vpop.permute.xlu0 %292
      %v295 = vld [vmem:[%s4] sm:$0xff]
      %v296 = vld [vmem:[%s5] sm:$0xff]
      %298 = vset.pattern.permute.xlu0 0
      %299 = vperm.xlu0 %298, %v296
      %v300 = vpop.permute.xlu0 %299
      %vm302 = vcmask 588800
      %v304 = vsel %vm302, %v295, 0
      %306 = vmatpush.msra.mxu0 0.0
      %307 = vmatpush.msra.mxu0 0.0
      %308 = vmatpush.msra.mxu0 0.0
      %309 = vmatpush.msra.mxu0 0.0
      %310 = vmatpush.msra.mxu0 0.0
      %311 = vmatpush.msra.mxu0 0.0
      %312 = vmatpush.msra.mxu0 0.0
      %313 = vmatpush.msra.mxu0 %v293
      %314 = vmatpush.msra.mxu0 %v290
      %315 = vmatpush.msra.mxu0 %v287
      %316 = vmatpush.msra.mxu0 %v284
      %317 = vmatpush.msra.mxu0 %v281
      %318 = vmatpush.msra.mxu0 %v278
      %319 = vmatpush.msra.mxu0 %v275
      %320 = vmatpush.msra.mxu0 %v272
      %321 = vmatpush.msra.mxu0 %v269
      %322 = vmatmul.f32.gmra.mxu0 %v304
      %v323 = vpop.f32.mrf.mxu0
      %v324 = vadd.f32 %v300, %v323
      %325 = vdwg.mxu0
      %vm326 = vcmask 654336
      %327 = vst.msk [vmem:[%s246] sm:$0xff] %vm326, %v324
      %p328 = scmp.lt.s32.totalorder %s17, 1
      %s329 = scalar_select %p328, %s17, 1
      %s330 = smul.addr %s329, 8
      %s331 = scalar_lea.vmem %s6, %s330
      // Predicated region
      $region45: #{conv_group_forward.9} parent=43 // pred_check
        %p332 = pneg %p166
      $region46: #{conv_group_forward.9} parent=43 // pred_check_branch
        %334 = sbr.rel (%p332) target = $region48
      $region47: #{conv_group_forward.9} parent=43 // pred_region
        _
      $region48: #{conv_group_forward.9} parent=43 // pred_fallthru
        _
    $region44: #{conv_group_forward.9} parent=5 // pred_fallthru
      _
    %p335 = scmp.le.s32.totalorder 2, %s12
    // Predicated region
    $region49: #{conv_group_forward.9} parent=5 // pred_check
      %p336 = pneg %p335
    $region50: #{conv_group_forward.9} parent=5 // pred_check_branch
      %338 = sbr.rel (%p336) target = $region52
    $region51: #{conv_group_forward.9} parent=5 // pred_region
      %s339 = ssub.s32 %s12, 2
      // Predicated region
      $region53: #{conv_group_forward.9} parent=51 // pred_check
        %p340 = pneg %p172
      $region54: #{conv_group_forward.9} parent=51 // pred_check_branch
        %342 = sbr.rel (%p340) target = $region56
      $region55: #{conv_group_forward.9} parent=51 // pred_region
        %p343 = scmp.lt.s32.totalorder %s18, 1
        %s344 = scalar_select %p343, %s18, 1
        %s345 = smul.addr %s344, 8
        %s346 = scalar_lea.vmem %s6, %s345
      $region56: #{conv_group_forward.9} parent=51 // pred_fallthru
        _
    $region52: #{conv_group_forward.9} parent=5 // pred_fallthru
      _
  $region6: #{conv_group_forward.9} parent=0 // loop_footer
    %s16 = sadd.s32 1, %s12
  $region7: #{conv_group_forward.9} parent=0 // loop_footer_branch
    %11 = sbr.rel target = $region3
  $region8: #{conv_group_forward.9} parent=0 // loop_exit
    _

// kernel: conv_group_forward.8
$region0: #{conv_group_forward.8}
  #allocation0 [shape = 'u32[]', space=smem, size = 0x4, offset = 0x4, fixed_abs, tag = 'smem constant byte address 0x4 - core index']
  #allocation1 [shape = 'u32[72,128]{1,0:T(1,128)}', space=vmem, size = 0x9000, scoped, tag = 'internal scratch']
  %s0 = inlined_call_operand.vmem [shape: f32[2,4,64], index: 0, kind: input, shape index: {}]
  %s1 = inlined_call_operand.vmem [shape: f32[8,4], index: 1, kind: input, shape index: {}]
  %s2 = inlined_call_operand.vmem [shape: f32[8,1], index: 2, kind: input, shape index: {}]
  %s3 = inlined_call_operand.vmem [shape: f32[2,8,64], index: 3, kind: output, shape index: {}]
  %s4 = sld [smem:[#allocation0]]
  $region45: #{conv_group_forward.8} parent=0
    _
  %s6 = ssub.s32 1, %s4
  %s7 = scalar_select 0, %s6, %s4
  loop: start=0, step=1, limit=4
  $region2: #{conv_group_forward.8} parent=0 // loop_pre_header
    _
  $region3: #{conv_group_forward.8} parent=0 // loop_header
    %s9 = sphi 0, %s13
    %p10 = scmp.ge.s32.totalorder %s9, 4
    %s19 = sphi 0, %s21
    %s22 = sphi 0, %s19
    %s23 = sphi 0, %s22
    %s39 = sphi 0, %s23
    %s43 = sphi 0, %s43
    %s45 = sphi 0, %s43
    %s46 = sphi 0, %s45
    %s60 = sphi 0, %s46
    %s64 = sphi 0, %s64
    %s66 = sphi 0, %s64
    %s67 = sphi 0, %s66
    %s81 = sphi 0, %s67
    %s87 = sphi 0, %s89
    %s90 = sphi 0, %s87
    %s91 = sphi 0, %s90
    %s107 = sphi 0, %s91
  $region4: #{conv_group_forward.8} parent=0 // loop_header_branch
    %12 = sbr.rel (%p10) target = $region8
  $region5: #{conv_group_forward.8} parent=0 // loop_body
    %s14 = ssub.s32 %s9, 1
    %s15 = ssub.s32 %s9, 2
    %s16 = sadd.s32 %s9, 1
    %s17 = ssub.s32 %s9, %s16
    %p18 = scmp.eq.s32.totalorder %s17, 0
    %s20 = sadd.s32 %s19, 1
    %s21 = scalar_select %p18, %s19, %s20
    %p24 = pneg %p18
    %p25 = scmp.eq.s32.totalorder %s9, 1
    %p26 = por %p24, %p25
    %p27 = scmp.ne.s32.totalorder %s19, %s22
    %p28 = scmp.eq.s32.totalorder %s9, 0
    %p29 = por %p27, %p28
    %p30 = scmp.ne.s32.totalorder %s19, %s22
    %p31 = scmp.eq.s32.totalorder %s14, 1
    %p32 = por %p30, %p31
    %p33 = scmp.ne.s32.totalorder %s22, %s23
    %p34 = scmp.eq.s32.totalorder %s14, 0
    %p35 = por %p33, %p34
    %p36 = scmp.ne.s32.totalorder %s22, %s23
    %p37 = scmp.eq.s32.totalorder %s15, 1
    %p38 = por %p36, %p37
    %p40 = scmp.ne.s32.totalorder %s23, %s39
    %p41 = scmp.eq.s32.totalorder %s15, 0
    %p42 = por %p40, %p41
    %s44 = sadd.s32 %s43, 1
    %p47 = scmp.eq.s32.totalorder %s9, 1
    %p48 = scmp.ne.s32.totalorder %s43, %s45
    %p49 = scmp.eq.s32.totalorder %s9, 0
    %p50 = por %p48, %p49
    %p51 = scmp.ne.s32.totalorder %s43, %s45
    %p52 = scmp.eq.s32.totalorder %s14, 1
    %p53 = por %p51, %p52
    %p54 = scmp.ne.s32.totalorder %s45, %s46
    %p55 = scmp.eq.s32.totalorder %s14, 0
    %p56 = por %p54, %p55
    %p57 = scmp.ne.s32.totalorder %s45, %s46
    %p58 = scmp.eq.s32.totalorder %s15, 1
    %p59 = por %p57, %p58
    %p61 = scmp.ne.s32.totalorder %s46, %s60
    %p62 = scmp.eq.s32.totalorder %s15, 0
    %p63 = por %p61, %p62
    %s65 = sadd.s32 %s64, 1
    %p68 = scmp.eq.s32.totalorder %s9, 1
    %p69 = scmp.ne.s32.totalorder %s64, %s66
    %p70 = scmp.eq.s32.totalorder %s9, 0
    %p71 = por %p69, %p70
    %p72 = scmp.ne.s32.totalorder %s64, %s66
    %p73 = scmp.eq.s32.totalorder %s14, 1
    %p74 = por %p72, %p73
    %p75 = scmp.ne.s32.totalorder %s66, %s67
    %p76 = scmp.eq.s32.totalorder %s14, 0
    %p77 = por %p75, %p76
    %p78 = scmp.ne.s32.totalorder %s66, %s67
    %p79 = scmp.eq.s32.totalorder %s15, 1
    %p80 = por %p78, %p79
    %p82 = scmp.ne.s32.totalorder %s67, %s81
    %p83 = scmp.eq.s32.totalorder %s15, 0
    %p84 = por %p82, %p83
    %s85 = ssub.s32 %s9, %s16
    %p86 = scmp.eq.s32.totalorder %s85, 0
    %s88 = sadd.s32 %s87, 1
    %s89 = scalar_select %p86, %s87, %s88
    %p92 = pneg %p86
    %p93 = scmp.eq.s32.totalorder %s9, 1
    %p94 = por %p92, %p93
    %p95 = scmp.ne.s32.totalorder %s87, %s90
    %p96 = scmp.eq.s32.totalorder %s9, 0
    %p97 = por %p95, %p96
    %p98 = scmp.ne.s32.totalorder %s87, %s90
    %p99 = scmp.eq.s32.totalorder %s14, 1
    %p100 = por %p98, %p99
    %p101 = scmp.ne.s32.totalorder %s90, %s91
    %p102 = scmp.eq.s32.totalorder %s14, 0
    %p103 = por %p101, %p102
    %p104 = scmp.ne.s32.totalorder %s90, %s91
    %p105 = scmp.eq.s32.totalorder %s15, 1
    %p106 = por %p104, %p105
    %p108 = scmp.ne.s32.totalorder %s91, %s107
    %p109 = scmp.eq.s32.totalorder %s15, 0
    %p110 = por %p108, %p109
    %p111 = scmp.le.s32.totalorder 1, %s9
    %p112 = scmp.lt.s32.totalorder %s9, 3
    %p113 = pnand %p111, %p112
    %p114 = pneg %p113
    // Predicated region
    $region9: #{conv_group_forward.8} parent=5 // pred_check
      _
    $region10: #{conv_group_forward.8} parent=5 // pred_check_branch
      %116 = sbr.rel (%p113) target = $region12
    $region11: #{conv_group_forward.8} parent=5 // pred_region
      %s117 = ssub.s32 %s9, 1
      // Predicated region
      $region13: #{conv_group_forward.8} parent=11 // pred_check
        %p118 = pneg %p56
      $region14: #{conv_group_forward.8} parent=11 // pred_check_branch
        %120 = sbr.rel (%p118) target = $region16
      $region15: #{conv_group_forward.8} parent=11 // pred_region
        _
      $region16: #{conv_group_forward.8} parent=11 // pred_fallthru
        _
      // Predicated region
      $region17: #{conv_group_forward.8} parent=11 // pred_check
        %p121 = pneg %p77
      $region18: #{conv_group_forward.8} parent=11 // pred_check_branch
        %123 = sbr.rel (%p121) target = $region20
      $region19: #{conv_group_forward.8} parent=11 // pred_region
        _
      $region20: #{conv_group_forward.8} parent=11 // pred_fallthru
        _
    $region12: #{conv_group_forward.8} parent=5 // pred_fallthru
      _
    %p124 = scmp.lt.s32.totalorder %s9, 2
    // Predicated region
    $region21: #{conv_group_forward.8} parent=5 // pred_check
      %p125 = pneg %p124
    $region22: #{conv_group_forward.8} parent=5 // pred_check_branch
      %127 = sbr.rel (%p125) target = $region24
    $region23: #{conv_group_forward.8} parent=5 // pred_region
      // Predicated region
      $region25: #{conv_group_forward.8} parent=23 // pred_check
        %p128 = pneg %p29
      $region26: #{conv_group_forward.8} parent=23 // pred_check_branch
        %130 = sbr.rel (%p128) target = $region28
      $region27: #{conv_group_forward.8} parent=23 // pred_region
        %p131 = scmp.lt.s32.totalorder %s9, 1
        %s132 = scalar_select %p131, %s9, 1
        %s133 = smul.addr %s132, 4
        %s134 = scalar_lea.vmem %s0, %s133
      $region28: #{conv_group_forward.8} parent=23 // pred_fallthru
        _
    $region24: #{conv_group_forward.8} parent=5 // pred_fallthru
      _
    %p135 = scmp.le.s32.totalorder 1, %s9
    %p136 = scmp.lt.s32.totalorder %s9, 3
    %p137 = pnand %p135, %p136
    %p138 = pneg %p137
    // Predicated region
    $region29: #{conv_group_forward.8} parent=5 // pred_check
      _
    $region30: #{conv_group_forward.8} parent=5 // pred_check_branch
      %140 = sbr.rel (%p137) target = $region32
    $region31: #{conv_group_forward.8} parent=5 // pred_region
      %s141 = ssub.s32 %s9, 1
      %p142 = scmp.lt.s32.totalorder %s14, 1
      %s143 = scalar_select %p142, %s14, 1
      %s144 = smul.addr %s143, 4
      %s145 = scalar_lea.vmem %s0, %s144
      %p146 = pneg %p35
      %p147 = pneg %p32
      %p148 = pneg %p56
      %p149 = pneg %p53
      %p150 = pneg %p77
      %p151 = pneg %p74
      %p152 = pneg %p103
      %p153 = pneg %p100
      %p154 = scmp.lt.s32.totalorder %s14, 1
      %s155 = scalar_select %p154, %s14, 1
      %s156 = smul.addr %s155, 8
      %s157 = scalar_lea.vmem %s3, %s156
      %p158 = scmp.lt.s32.totalorder %s14, 1
      %s159 = scalar_select %p158, %s14, 1
      %s160 = smul.addr %s159, 4
      %s161 = scalar_lea.vmem %s0, %s160
      %p162 = scmp.lt.s32.totalorder %s14, 1
      %s163 = scalar_select %p162, %s14, 1
      %s164 = smul.addr %s163, 8
      %s165 = scalar_lea.vmem %s3, %s164
      %v166 = vld [vmem:[%s1] sm:$0xff]
      %v167 = vld [vmem:[%s161] sm:$0xf]
      %v168 = vld [vmem:[%s2] sm:$0xff]
      %170 = vset.pattern.permute.xlu0 0
      %171 = vperm.xlu0 %170, %v168
      %v172 = vpop.permute.xlu0 %171
      %vm174 = vcmask 31744
      %v176 = vsel %vm174, %v166, 0
      %vm178 = vcmask 1043456
      %v180 = vsel %vm178, %v167, 0
      %182 = vmatpush.msra.mxu0 0.0
      %183 = vmatpush.msra.mxu0 0.0
      %184 = vmatpush.msra.mxu0 0.0
      %185 = vmatpush.msra.mxu0 0.0
      %186 = vmatpush.msra.mxu0 0.0
      %187 = vmatpush.msra.mxu0 0.0
      %188 = vmatpush.msra.mxu0 0.0
      %189 = vmatpush.msra.mxu0 0.0
      %190 = vmatpush.msra.mxu0 0.0
      %191 = vmatpush.msra.mxu0 0.0
      %192 = vmatpush.msra.mxu0 0.0
      %193 = vmatpush.msra.mxu0 0.0
      %194 = vmatpush.msra.mxu0 0.0
      %195 = vmatpush.msra.mxu0 0.0
      %196 = vmatpush.msra.mxu0 0.0
      %197 = vmatpush.msra.mxu0 %v180
      %198 = vmatmul.f32.gmra.mxu0 %v176
      %v199 = vpop.f32.mrf.mxu0
      %v200 = vadd.f32 %v172, %v199
      %201 = vdwg.mxu0
      %vm202 = vcmask 523264
      %203 = vst.msk [vmem:[%s165] sm:$0xff] %vm202, %v200
      %p204 = scmp.lt.s32.totalorder %s14, 1
      %s205 = scalar_select %p204, %s14, 1
      %s206 = smul.addr %s205, 8
      %s207 = scalar_lea.vmem %s3, %s206
      // Predicated region
      $region33: #{conv_group_forward.8} parent=31 // pred_check
        %p208 = pneg %p100
      $region34: #{conv_group_forward.8} parent=31 // pred_check_branch
        %210 = sbr.rel (%p208) target = $region36
      $region35: #{conv_group_forward.8} parent=31 // pred_region
        _
      $region36: #{conv_group_forward.8} parent=31 // pred_fallthru
        _
    $region32: #{conv_group_forward.8} parent=5 // pred_fallthru
      _
    %p211 = scmp.le.s32.totalorder 2, %s9
    // Predicated region
    $region37: #{conv_group_forward.8} parent=5 // pred_check
      %p212 = pneg %p211
    $region38: #{conv_group_forward.8} parent=5 // pred_check_branch
      %214 = sbr.rel (%p212) target = $region40
    $region39: #{conv_group_forward.8} parent=5 // pred_region
      %s215 = ssub.s32 %s9, 2
      // Predicated region
      $region41: #{conv_group_forward.8} parent=39 // pred_check
        %p216 = pneg %p106
      $region42: #{conv_group_forward.8} parent=39 // pred_check_branch
        %218 = sbr.rel (%p216) target = $region44
      $region43: #{conv_group_forward.8} parent=39 // pred_region
        %p219 = scmp.lt.s32.totalorder %s15, 1
        %s220 = scalar_select %p219, %s15, 1
        %s221 = smul.addr %s220, 8
        %s222 = scalar_lea.vmem %s3, %s221
      $region44: #{conv_group_forward.8} parent=39 // pred_fallthru
        _
    $region40: #{conv_group_forward.8} parent=5 // pred_fallthru
      _
  $region6: #{conv_group_forward.8} parent=0 // loop_footer
    %s13 = sadd.s32 1, %s9
  $region7: #{conv_group_forward.8} parent=0 // loop_footer_branch
    %8 = sbr.rel target = $region3
  $region8: #{conv_group_forward.8} parent=0 // loop_exit
    _

// kernel: conv_group_forward.11
$region0: #{conv_group_forward.11}
  #allocation0 [shape = 'u32[]', space=smem, size = 0x4, offset = 0x4, fixed_abs, tag = 'smem constant byte address 0x4 - core index']
  #allocation1 [shape = 'u32[72,128]{1,0:T(1,128)}', space=vmem, size = 0x9000, scoped, tag = 'internal scratch']
  %s0 = inlined_call_operand.vmem [shape: f32[2,8,110], index: 0, kind: input, shape index: {}]
  %s1 = inlined_call_operand.vmem [shape: f32[8,1], index: 1, kind: input, shape index: {}]
  %s2 = inlined_call_operand.vmem [shape: f32[8,1], index: 2, kind: input, shape index: {}]
  %s3 = inlined_call_operand.vmem [shape: f32[1,110], index: 3, kind: input, shape index: {}]
  %s4 = inlined_call_operand.vmem [shape: f32[8,72], index: 4, kind: input, shape index: {}]
  %s5 = inlined_call_operand.vmem [shape: f32[8,1], index: 5, kind: input, shape index: {}]
  %s6 = inlined_call_operand.vmem [shape: f32[2,8,110], index: 6, kind: input, shape index: {}]
  %s7 = inlined_call_operand.vmem [shape: f32[8,1], index: 7, kind: input, shape index: {}]
  %s8 = inlined_call_operand.vmem [shape: f32[8,1], index: 8, kind: input, shape index: {}]
  %s9 = inlined_call_operand.vmem [shape: f32[2,8,80], index: 9, kind: output, shape index: {}]
  %s10 = sld [smem:[#allocation0]]
  $region69: #{conv_group_forward.11} parent=0
    _
  %s12 = ssub.s32 1, %s10
  %s13 = scalar_select 0, %s12, %s10
  loop: start=0, step=1, limit=4
  $region2: #{conv_group_forward.11} parent=0 // loop_pre_header
    _
  $region3: #{conv_group_forward.11} parent=0 // loop_header
    %s15 = sphi 0, %s19
    %p16 = scmp.ge.s32.totalorder %s15, 4
    %s25 = sphi 0, %s27
    %s28 = sphi 0, %s25
    %s29 = sphi 0, %s28
    %s45 = sphi 0, %s29
    %s49 = sphi 0, %s49
    %s51 = sphi 0, %s49
    %s52 = sphi 0, %s51
    %s66 = sphi 0, %s52
    %s70 = sphi 0, %s70
    %s72 = sphi 0, %s70
    %s73 = sphi 0, %s72
    %s87 = sphi 0, %s73
    %s91 = sphi 0, %s91
    %s93 = sphi 0, %s91
    %s94 = sphi 0, %s93
    %s108 = sphi 0, %s94
    %s112 = sphi 0, %s112
    %s114 = sphi 0, %s112
    %s115 = sphi 0, %s114
    %s129 = sphi 0, %s115
    %s133 = sphi 0, %s133
    %s135 = sphi 0, %s133
    %s136 = sphi 0, %s135
    %s150 = sphi 0, %s136
    %s156 = sphi 0, %s158
    %s159 = sphi 0, %s156
    %s160 = sphi 0, %s159
    %s176 = sphi 0, %s160
    %s180 = sphi 0, %s180
    %s182 = sphi 0, %s180
    %s183 = sphi 0, %s182
    %s197 = sphi 0, %s183
    %s201 = sphi 0, %s201
    %s203 = sphi 0, %s201
    %s204 = sphi 0, %s203
    %s218 = sphi 0, %s204
    %s224 = sphi 0, %s226
    %s227 = sphi 0, %s224
    %s228 = sphi 0, %s227
    %s244 = sphi 0, %s228
  $region4: #{conv_group_forward.11} parent=0 // loop_header_branch
    %18 = sbr.rel (%p16) target = $region8
  $region5: #{conv_group_forward.11} parent=0 // loop_body
    %s20 = ssub.s32 %s15, 1
    %s21 = ssub.s32 %s15, 2
    %s22 = sadd.s32 %s15, 1
    %s23 = ssub.s32 %s15, %s22
    %p24 = scmp.eq.s32.totalorder %s23, 0
    %s26 = sadd.s32 %s25, 1
    %s27 = scalar_select %p24, %s25, %s26
    %p30 = pneg %p24
    %p31 = scmp.eq.s32.totalorder %s15, 1
    %p32 = por %p30, %p31
    %p33 = scmp.ne.s32.totalorder %s25, %s28
    %p34 = scmp.eq.s32.totalorder %s15, 0
    %p35 = por %p33, %p34
    %p36 = scmp.ne.s32.totalorder %s25, %s28
    %p37 = scmp.eq.s32.totalorder %s20, 1
    %p38 = por %p36, %p37
    %p39 = scmp.ne.s32.totalorder %s28, %s29
    %p40 = scmp.eq.s32.totalorder %s20, 0
    %p41 = por %p39, %p40
    %p42 = scmp.ne.s32.totalorder %s28, %s29
    %p43 = scmp.eq.s32.totalorder %s21, 1
    %p44 = por %p42, %p43
    %p46 = scmp.ne.s32.totalorder %s29, %s45
    %p47 = scmp.eq.s32.totalorder %s21, 0
    %p48 = por %p46, %p47
    %s50 = sadd.s32 %s49, 1
    %p53 = scmp.eq.s32.totalorder %s15, 1
    %p54 = scmp.ne.s32.totalorder %s49, %s51
    %p55 = scmp.eq.s32.totalorder %s15, 0
    %p56 = por %p54, %p55
    %p57 = scmp.ne.s32.totalorder %s49, %s51
    %p58 = scmp.eq.s32.totalorder %s20, 1
    %p59 = por %p57, %p58
    %p60 = scmp.ne.s32.totalorder %s51, %s52
    %p61 = scmp.eq.s32.totalorder %s20, 0
    %p62 = por %p60, %p61
    %p63 = scmp.ne.s32.totalorder %s51, %s52
    %p64 = scmp.eq.s32.totalorder %s21, 1
    %p65 = por %p63, %p64
    %p67 = scmp.ne.s32.totalorder %s52, %s66
    %p68 = scmp.eq.s32.totalorder %s21, 0
    %p69 = por %p67, %p68
    %s71 = sadd.s32 %s70, 1
    %p74 = scmp.eq.s32.totalorder %s15, 1
    %p75 = scmp.ne.s32.totalorder %s70, %s72
    %p76 = scmp.eq.s32.totalorder %s15, 0
    %p77 = por %p75, %p76
    %p78 = scmp.ne.s32.totalorder %s70, %s72
    %p79 = scmp.eq.s32.totalorder %s20, 1
    %p80 = por %p78, %p79
    %p81 = scmp.ne.s32.totalorder %s72, %s73
    %p82 = scmp.eq.s32.totalorder %s20, 0
    %p83 = por %p81, %p82
    %p84 = scmp.ne.s32.totalorder %s72, %s73
    %p85 = scmp.eq.s32.totalorder %s21, 1
    %p86 = por %p84, %p85
    %p88 = scmp.ne.s32.totalorder %s73, %s87
    %p89 = scmp.eq.s32.totalorder %s21, 0
    %p90 = por %p88, %p89
    %s92 = sadd.s32 %s91, 1
    %p95 = scmp.eq.s32.totalorder %s15, 1
    %p96 = scmp.ne.s32.totalorder %s91, %s93
    %p97 = scmp.eq.s32.totalorder %s15, 0
    %p98 = por %p96, %p97
    %p99 = scmp.ne.s32.totalorder %s91, %s93
    %p100 = scmp.eq.s32.totalorder %s20, 1
    %p101 = por %p99, %p100
    %p102 = scmp.ne.s32.totalorder %s93, %s94
    %p103 = scmp.eq.s32.totalorder %s20, 0
    %p104 = por %p102, %p103
    %p105 = scmp.ne.s32.totalorder %s93, %s94
    %p106 = scmp.eq.s32.totalorder %s21, 1
    %p107 = por %p105, %p106
    %p109 = scmp.ne.s32.totalorder %s94, %s108
    %p110 = scmp.eq.s32.totalorder %s21, 0
    %p111 = por %p109, %p110
    %s113 = sadd.s32 %s112, 1
    %p116 = scmp.eq.s32.totalorder %s15, 1
    %p117 = scmp.ne.s32.totalorder %s112, %s114
    %p118 = scmp.eq.s32.totalorder %s15, 0
    %p119 = por %p117, %p118
    %p120 = scmp.ne.s32.totalorder %s112, %s114
    %p121 = scmp.eq.s32.totalorder %s20, 1
    %p122 = por %p120, %p121
    %p123 = scmp.ne.s32.totalorder %s114, %s115
    %p124 = scmp.eq.s32.totalorder %s20, 0
    %p125 = por %p123, %p124
    %p126 = scmp.ne.s32.totalorder %s114, %s115
    %p127 = scmp.eq.s32.totalorder %s21, 1
    %p128 = por %p126, %p127
    %p130 = scmp.ne.s32.totalorder %s115, %s129
    %p131 = scmp.eq.s32.totalorder %s21, 0
    %p132 = por %p130, %p131
    %s134 = sadd.s32 %s133, 1
    %p137 = scmp.eq.s32.totalorder %s15, 1
    %p138 = scmp.ne.s32.totalorder %s133, %s135
    %p139 = scmp.eq.s32.totalorder %s15, 0
    %p140 = por %p138, %p139
    %p141 = scmp.ne.s32.totalorder %s133, %s135
    %p142 = scmp.eq.s32.totalorder %s20, 1
    %p143 = por %p141, %p142
    %p144 = scmp.ne.s32.totalorder %s135, %s136
    %p145 = scmp.eq.s32.totalorder %s20, 0
    %p146 = por %p144, %p145
    %p147 = scmp.ne.s32.totalorder %s135, %s136
    %p148 = scmp.eq.s32.totalorder %s21, 1
    %p149 = por %p147, %p148
    %p151 = scmp.ne.s32.totalorder %s136, %s150
    %p152 = scmp.eq.s32.totalorder %s21, 0
    %p153 = por %p151, %p152
    %s154 = ssub.s32 %s15, %s22
    %p155 = scmp.eq.s32.totalorder %s154, 0
    %s157 = sadd.s32 %s156, 1
    %s158 = scalar_select %p155, %s156, %s157
    %p161 = pneg %p155
    %p162 = scmp.eq.s32.totalorder %s15, 1
    %p163 = por %p161, %p162
    %p164 = scmp.ne.s32.totalorder %s156, %s159
    %p165 = scmp.eq.s32.totalorder %s15, 0
    %p166 = por %p164, %p165
    %p167 = scmp.ne.s32.totalorder %s156, %s159
    %p168 = scmp.eq.s32.totalorder %s20, 1
    %p169 = por %p167, %p168
    %p170 = scmp.ne.s32.totalorder %s159, %s160
    %p171 = scmp.eq.s32.totalorder %s20, 0
    %p172 = por %p170, %p171
    %p173 = scmp.ne.s32.totalorder %s159, %s160
    %p174 = scmp.eq.s32.totalorder %s21, 1
    %p175 = por %p173, %p174
    %p177 = scmp.ne.s32.totalorder %s160, %s176
    %p178 = scmp.eq.s32.totalorder %s21, 0
    %p179 = por %p177, %p178
    %s181 = sadd.s32 %s180, 1
    %p184 = scmp.eq.s32.totalorder %s15, 1
    %p185 = scmp.ne.s32.totalorder %s180, %s182
    %p186 = scmp.eq.s32.totalorder %s15, 0
    %p187 = por %p185, %p186
    %p188 = scmp.ne.s32.totalorder %s180, %s182
    %p189 = scmp.eq.s32.totalorder %s20, 1
    %p190 = por %p188, %p189
    %p191 = scmp.ne.s32.totalorder %s182, %s183
    %p192 = scmp.eq.s32.totalorder %s20, 0
    %p193 = por %p191, %p192
    %p194 = scmp.ne.s32.totalorder %s182, %s183
    %p195 = scmp.eq.s32.totalorder %s21, 1
    %p196 = por %p194, %p195
    %p198 = scmp.ne.s32.totalorder %s183, %s197
    %p199 = scmp.eq.s32.totalorder %s21, 0
    %p200 = por %p198, %p199
    %s202 = sadd.s32 %s201, 1
    %p205 = scmp.eq.s32.totalorder %s15, 1
    %p206 = scmp.ne.s32.totalorder %s201, %s203
    %p207 = scmp.eq.s32.totalorder %s15, 0
    %p208 = por %p206, %p207
    %p209 = scmp.ne.s32.totalorder %s201, %s203
    %p210 = scmp.eq.s32.totalorder %s20, 1
    %p211 = por %p209, %p210
    %p212 = scmp.ne.s32.totalorder %s203, %s204
    %p213 = scmp.eq.s32.totalorder %s20, 0
    %p214 = por %p212, %p213
    %p215 = scmp.ne.s32.totalorder %s203, %s204
    %p216 = scmp.eq.s32.totalorder %s21, 1
    %p217 = por %p215, %p216
    %p219 = scmp.ne.s32.totalorder %s204, %s218
    %p220 = scmp.eq.s32.totalorder %s21, 0
    %p221 = por %p219, %p220
    %s222 = ssub.s32 %s15, %s22
    %p223 = scmp.eq.s32.totalorder %s222, 0
    %s225 = sadd.s32 %s224, 1
    %s226 = scalar_select %p223, %s224, %s225
    %p229 = pneg %p223
    %p230 = scmp.eq.s32.totalorder %s15, 1
    %p231 = por %p229, %p230
    %p232 = scmp.ne.s32.totalorder %s224, %s227
    %p233 = scmp.eq.s32.totalorder %s15, 0
    %p234 = por %p232, %p233
    %p235 = scmp.ne.s32.totalorder %s224, %s227
    %p236 = scmp.eq.s32.totalorder %s20, 1
    %p237 = por %p235, %p236
    %p238 = scmp.ne.s32.totalorder %s227, %s228
    %p239 = scmp.eq.s32.totalorder %s20, 0
    %p240 = por %p238, %p239
    %p241 = scmp.ne.s32.totalorder %s227, %s228
    %p242 = scmp.eq.s32.totalorder %s21, 1
    %p243 = por %p241, %p242
    %p245 = scmp.ne.s32.totalorder %s228, %s244
    %p246 = scmp.eq.s32.totalorder %s21, 0
    %p247 = por %p245, %p246
    %p248 = scmp.le.s32.totalorder 1, %s15
    %p249 = scmp.lt.s32.totalorder %s15, 3
    %p250 = pnand %p248, %p249
    %p251 = pneg %p250
    // Predicated region
    $region9: #{conv_group_forward.11} parent=5 // pred_check
      _
    $region10: #{conv_group_forward.11} parent=5 // pred_check_branch
      %253 = sbr.rel (%p250) target = $region12
    $region11: #{conv_group_forward.11} parent=5 // pred_region
      %s254 = ssub.s32 %s15, 1
      // Predicated region
      $region13: #{conv_group_forward.11} parent=11 // pred_check
        %p255 = pneg %p62
      $region14: #{conv_group_forward.11} parent=11 // pred_check_branch
        %257 = sbr.rel (%p255) target = $region16
      $region15: #{conv_group_forward.11} parent=11 // pred_region
        _
      $region16: #{conv_group_forward.11} parent=11 // pred_fallthru
        _
      // Predicated region
      $region17: #{conv_group_forward.11} parent=11 // pred_check
        %p258 = pneg %p83
      $region18: #{conv_group_forward.11} parent=11 // pred_check_branch
        %260 = sbr.rel (%p258) target = $region20
      $region19: #{conv_group_forward.11} parent=11 // pred_region
        _
      $region20: #{conv_group_forward.11} parent=11 // pred_fallthru
        _
      // Predicated region
      $region21: #{conv_group_forward.11} parent=11 // pred_check
        %p261 = pneg %p104
      $region22: #{conv_group_forward.11} parent=11 // pred_check_branch
        %263 = sbr.rel (%p261) target = $region24
      $region23: #{conv_group_forward.11} parent=11 // pred_region
        _
      $region24: #{conv_group_forward.11} parent=11 // pred_fallthru
        _
      // Predicated region
      $region25: #{conv_group_forward.11} parent=11 // pred_check
        %p264 = pneg %p125
      $region26: #{conv_group_forward.11} parent=11 // pred_check_branch
        %266 = sbr.rel (%p264) target = $region28
      $region27: #{conv_group_forward.11} parent=11 // pred_region
        _
      $region28: #{conv_group_forward.11} parent=11 // pred_fallthru
        _
      // Predicated region
      $region29: #{conv_group_forward.11} parent=11 // pred_check
        %p267 = pneg %p146
      $region30: #{conv_group_forward.11} parent=11 // pred_check_branch
        %269 = sbr.rel (%p267) target = $region32
      $region31: #{conv_group_forward.11} parent=11 // pred_region
        _
      $region32: #{conv_group_forward.11} parent=11 // pred_fallthru
        _
      // Predicated region
      $region33: #{conv_group_forward.11} parent=11 // pred_check
        %p270 = pneg %p193
      $region34: #{conv_group_forward.11} parent=11 // pred_check_branch
        %272 = sbr.rel (%p270) target = $region36
      $region35: #{conv_group_forward.11} parent=11 // pred_region
        _
      $region36: #{conv_group_forward.11} parent=11 // pred_fallthru
        _
      // Predicated region
      $region37: #{conv_group_forward.11} parent=11 // pred_check
        %p273 = pneg %p214
      $region38: #{conv_group_forward.11} parent=11 // pred_check_branch
        %275 = sbr.rel (%p273) target = $region40
      $region39: #{conv_group_forward.11} parent=11 // pred_region
        _
      $region40: #{conv_group_forward.11} parent=11 // pred_fallthru
        _
    $region12: #{conv_group_forward.11} parent=5 // pred_fallthru
      _
    %p276 = scmp.lt.s32.totalorder %s15, 2
    // Predicated region
    $region41: #{conv_group_forward.11} parent=5 // pred_check
      %p277 = pneg %p276
    $region42: #{conv_group_forward.11} parent=5 // pred_check_branch
      %279 = sbr.rel (%p277) target = $region44
    $region43: #{conv_group_forward.11} parent=5 // pred_region
      // Predicated region
      $region45: #{conv_group_forward.11} parent=43 // pred_check
        %p280 = pneg %p35
      $region46: #{conv_group_forward.11} parent=43 // pred_check_branch
        %282 = sbr.rel (%p280) target = $region48
      $region47: #{conv_group_forward.11} parent=43 // pred_region
        %p283 = scmp.lt.s32.totalorder %s15, 1
        %s284 = scalar_select %p283, %s15, 1
        %s285 = smul.addr %s284, 8
        %s286 = scalar_lea.vmem %s0, %s285
      $region48: #{conv_group_forward.11} parent=43 // pred_fallthru
        _
      // Predicated region
      $region49: #{conv_group_forward.11} parent=43 // pred_check
        %p287 = pneg %p166
      $region50: #{conv_group_forward.11} parent=43 // pred_check_branch
        %289 = sbr.rel (%p287) target = $region52
      $region51: #{conv_group_forward.11} parent=43 // pred_region
        %p290 = scmp.lt.s32.totalorder %s15, 1
        %s291 = scalar_select %p290, %s15, 1
        %s292 = smul.addr %s291, 8
        %s293 = scalar_lea.vmem %s6, %s292
      $region52: #{conv_group_forward.11} parent=43 // pred_fallthru
        _
    $region44: #{conv_group_forward.11} parent=5 // pred_fallthru
      _
    %p294 = scmp.le.s32.totalorder 1, %s15
    %p295 = scmp.lt.s32.totalorder %s15, 3
    %p296 = pnand %p294, %p295
    %p297 = pneg %p296
    // Predicated region
    $region53: #{conv_group_forward.11} parent=5 // pred_check
      _
    $region54: #{conv_group_forward.11} parent=5 // pred_check_branch
      %299 = sbr.rel (%p296) target = $region56
    $region55: #{conv_group_forward.11} parent=5 // pred_region
      %s300 = ssub.s32 %s15, 1
      %p301 = scmp.lt.s32.totalorder %s20, 1
      %s302 = scalar_select %p301, %s20, 1
      %s303 = smul.addr %s302, 8
      %s304 = scalar_lea.vmem %s0, %s303
      %p305 = pneg %p41
      %p306 = pneg %p38
      %p307 = pneg %p62
      %p308 = pneg %p59
      %p309 = pneg %p83
      %p310 = pneg %p80
      %p311 = pneg %p104
      %p312 = pneg %p101
      %p313 = pneg %p125
      %p314 = pneg %p122
      %p315 = pneg %p146
      %p316 = pneg %p143
      %p317 = scmp.lt.s32.totalorder %s20, 1
      %s318 = scalar_select %p317, %s20, 1
      %s319 = smul.addr %s318, 8
      %s320 = scalar_lea.vmem %s6, %s319
      %p321 = pneg %p172
      %p322 = pneg %p169
      %p323 = pneg %p193
      %p324 = pneg %p190
      %p325 = pneg %p214
      %p326 = pneg %p211
      %p327 = pneg %p240
      %p328 = pneg %p237
      %p329 = scmp.lt.s32.totalorder %s20, 1
      %s330 = scalar_select %p329, %s20, 1
      %s331 = smul.addr %s330, 8
      %s332 = scalar_lea.vmem %s9, %s331
      %p333 = scmp.lt.s32.totalorder %s20, 1
      %s334 = scalar_select %p333, %s20, 1
      %s335 = smul.addr %s334, 8
      %s336 = scalar_lea.vmem %s0, %s335
      %p337 = scmp.lt.s32.totalorder %s20, 1
      %s338 = scalar_select %p337, %s20, 1
      %s339 = smul.addr %s338, 8
      %s340 = scalar_lea.vmem %s6, %s339
      %p341 = scmp.lt.s32.totalorder %s20, 1
      %s342 = scalar_select %p341, %s20, 1
      %s343 = smul.addr %s342, 8
      %s344 = scalar_lea.vmem %s9, %s343
      %v345 = vld [vmem:[%s3] sm:$0x1]
      %v346 = vld [vmem:[%s336] sm:$0xff]
      %v347 = vld [vmem:[%s1] sm:$0xff]
      %349 = vset.pattern.permute.xlu0 0
      %350 = vperm.xlu0 %349, %v347
      %v351 = vpop.permute.xlu0 %350
      %v353 = vmul.f32 %v346, %v351
      %v354 = vld [vmem:[%s2] sm:$0xff]
      %356 = vset.pattern.permute.xlu0 0
      %357 = vperm.xlu0 %356, %v354
      %v358 = vpop.permute.xlu0 %357
      %v360 = vadd.f32 %v353, %v358
      %vm361 = vcmp.gt.f32.partialorder %v360, 0.0
      %v362 = vmul.f32 %v360, 0.1
      %v363 = vsel %vm361, %v360, %v362
      %v365 = vperm.slane %v345, 0
      %v367 = vmul.f32 %v365, %v363
      %369 = vrot.lane.b32.xlu0 %v367, 127
      %v370 = vpop.permute.xlu0 %369
      %372 = vrot.lane.b32.xlu0 %v367, 126
      %v373 = vpop.permute.xlu0 %372
      %375 = vrot.lane.b32.xlu0 %v367, 118
      %v376 = vpop.permute.xlu0 %375
      %378 = vrot.lane.b32.xlu0 %v367, 117
      %v379 = vpop.permute.xlu0 %378
      %381 = vrot.lane.b32.xlu0 %v367, 116
      %v382 = vpop.permute.xlu0 %381
      %384 = vrot.lane.b32.xlu0 %v367, 108
      %v385 = vpop.permute.xlu0 %384
      %387 = vrot.lane.b32.xlu0 %v367, 107
      %v388 = vpop.permute.xlu0 %387
      %390 = vrot.lane.b32.xlu0 %v367, 106
      %v391 = vpop.permute.xlu0 %390
      %v393 = vld [vmem:[%s4] sm:$0xff]
      %v394 = vld [vmem:[%s5] sm:$0xff]
      %396 = vset.pattern.permute.xlu0 0
      %397 = vperm.xlu0 %396, %v394
      %v398 = vpop.permute.xlu0 %397
      %vm400 = vcmask 588800
      %v402 = vsel %vm400, %v393, 0
      %404 = vmatpush.msra.mxu0 0.0
      %405 = vmatpush.msra.mxu0 0.0
      %406 = vmatpush.msra.mxu0 0.0
      %407 = vmatpush.msra.mxu0 0.0
      %408 = vmatpush.msra.mxu0 0.0
      %409 = vmatpush.msra.mxu0 0.0
      %410 = vmatpush.msra.mxu0 0.0
      %411 = vmatpush.msra.mxu0 %v391
      %412 = vmatpush.msra.mxu0 %v388
      %413 = vmatpush.msra.mxu0 %v385
      %414 = vmatpush.msra.mxu0 %v382
      %415 = vmatpush.msra.mxu0 %v379
      %416 = vmatpush.msra.mxu0 %v376
      %417 = vmatpush.msra.mxu0 %v373
      %418 = vmatpush.msra.mxu0 %v370
      %419 = vmatpush.msra.mxu0 %v367
      %420 = vmatmul.f32.gmra.mxu0 %v402
      %v421 = vpop.f32.mrf.mxu0
      %v422 = vadd.f32 %v398, %v421
      %423 = vdwg.mxu0
      %v424 = vld [vmem:[%s340] sm:$0xff]
      %v425 = vld [vmem:[%s7] sm:$0xff]
      %427 = vset.pattern.permute.xlu0 0
      %428 = vperm.xlu0 %427, %v425
      %v429 = vpop.permute.xlu0 %428
      %v431 = vmul.f32 %v424, %v429
      %v432 = vld [vmem:[%s8] sm:$0xff]
      %434 = vset.pattern.permute.xlu0 0
      %435 = vperm.xlu0 %434, %v432
      %v436 = vpop.permute.xlu0 %435
      %v438 = vadd.f32 %v431, %v436
      %vm439 = vcmp.gt.f32.partialorder %v438, 0.0
      %v440 = vmul.f32 %v438, 0.1
      %v441 = vsel %vm439, %v438, %v440
      %443 = vrot.lane.b32.xlu0 %v441, 117
      %v444 = vpop.permute.xlu0 %443
      %v446 = vadd.f32 %v422, %v444
      %vm447 = vcmask 654336
      %448 = vst.msk [vmem:[%s344] sm:$0xff] %vm447, %v446
      %p449 = scmp.lt.s32.totalorder %s20, 1
      %s450 = scalar_select %p449, %s20, 1
      %s451 = smul.addr %s450, 8
      %s452 = scalar_lea.vmem %s9, %s451
      // Predicated region
      $region57: #{conv_group_forward.11} parent=55 // pred_check
        %p453 = pneg %p237
      $region58: #{conv_group_forward.11} parent=55 // pred_check_branch
        %455 = sbr.rel (%p453) target = $region60
      $region59: #{conv_group_forward.11} parent=55 // pred_region
        _
      $region60: #{conv_group_forward.11} parent=55 // pred_fallthru
        _
    $region56: #{conv_group_forward.11} parent=5 // pred_fallthru
      _
    %p456 = scmp.le.s32.totalorder 2, %s15
    // Predicated region
    $region61: #{conv_group_forward.11} parent=5 // pred_check
      %p457 = pneg %p456
    $region62: #{conv_group_forward.11} parent=5 // pred_check_branch
      %459 = sbr.rel (%p457) target = $region64
    $region63: #{conv_group_forward.11} parent=5 // pred_region
      %s460 = ssub.s32 %s15, 2
      // Predicated region
      $region65: #{conv_group_forward.11} parent=63 // pred_check
        %p461 = pneg %p243
      $region66: #{conv_group_forward.11} parent=63 // pred_check_branch
        %463 = sbr.rel (%p461) target = $region68
      $region67: #{conv_group_forward.11} parent=63 // pred_region
        %p464 = scmp.lt.s32.totalorder %s21, 1
        %s465 = scalar_select %p464, %s21, 1
        %s466 = smul.addr %s465, 8
        %s467 = scalar_lea.vmem %s9, %s466
      $region68: #{conv_group_forward.11} parent=63 // pred_fallthru
        _
    $region64: #{conv_group_forward.11} parent=5 // pred_fallthru
      _
  $region6: #{conv_group_forward.11} parent=0 // loop_footer
    %s19 = sadd.s32 1, %s15
  $region7: #{conv_group_forward.11} parent=0 // loop_footer_branch
    %14 = sbr.rel target = $region3
  $region8: #{conv_group_forward.11} parent=0 // loop_exit
    _

</llo_original>
